<compile_context>
chip_gen: v5e
topology: v5e:2x2
jax: 0.10.0
libtpu: 0.0.40
codegen_flags: <defaults>
</compile_context>

<pallas_src>
import math
import functools

import jax
import jax.numpy as jnp
from jax.experimental import pallas as pl
from jax.experimental.pallas import tpu as pltpu

_NEG_INF = -1e30  # stands in for float('-inf'); exp() underflows to exactly 0


# ----------------------------- kernels ---------------------------------------


def _layer_norm(x, w, b, eps):
    mu = jnp.mean(x, axis=-1, keepdims=True)
    xc = x - mu
    var = jnp.mean(xc * xc, axis=-1, keepdims=True)
    return xc * jax.lax.rsqrt(var + eps) * w + b


def encoder_layers_kernel(
        x0_ref, mask_ref, wqkv_ref, bqkv_ref, wo_ref, bo_ref,
        ln1w_ref, ln1b_ref, w1_ref, b1_ref, w2_ref, b2_ref,
        ln2w_ref, ln2b_ref,
        psum_ref, x_ref, *, nhead, eps):
    layer = pl.program_id(1)
    n_layers = pl.num_programs(1)
    CB, A, D = x_ref.shape
    hd = D // nhead
    att_scale = 1.0 / math.sqrt(hd)
    bf16 = jnp.bfloat16

    # -------- prologue (layer 0): load the pooled/pos-encoded input block --------
    @pl.when(layer == 0)
    def _():
        x_ref[...] = x0_ref[...]

    # -------- one TransformerEncoderLayer (post-norm, ReLU, eval mode) --------
    x2 = x_ref[...].reshape(CB * A, D)            # f32 residual stream
    xb = x2.astype(bf16)

    # fused Q|K|V projection: single [D, 3D] bf16 matmul, f32 accumulate
    qkv = jnp.dot(xb, wqkv_ref[0], preferred_element_type=jnp.float32) + bqkv_ref[0]
    qb = (qkv[:, :D] * att_scale).astype(bf16).reshape(CB, A, D)
    kb = qkv[:, D:2 * D].astype(bf16).reshape(CB, A, D)
    vb = qkv[:, 2 * D:].astype(bf16).reshape(CB, A, D)

    # precomputed causal mask; broadcast hoisted out of the head loop
    mask3 = jnp.broadcast_to(mask_ref[...], (CB, A, A))

    # TODO(synk): a fully head-batched einsum needs an in-kernel
    # [C,A,H,hd]->[C,H,A,hd] relayout (Mosaic transpose); heads stay as a small
    # unrolled loop over bf16 lane-slices with one fused Wo matmul after concat.
    heads = []
    for h in range(nhead):
        sl = slice(h * hd, (h + 1) * hd)
        s = jnp.einsum('cqe,cke->cqk', qb[:, :, sl], kb[:, :, sl],
                       preferred_element_type=jnp.float32) + mask3
        m = jnp.max(s, axis=-1, keepdims=True)
        p = jnp.exp(s - m)
        p = p * pl.reciprocal(jnp.sum(p, axis=-1, keepdims=True), approx=True)
        heads.append(jnp.einsum('cqk,cke->cqe', p.astype(bf16), vb[:, :, sl],
                                preferred_element_type=jnp.float32))
    attn = jnp.concatenate(heads, axis=-1).reshape(CB * A, D)
    attn = jnp.dot(attn.astype(bf16), wo_ref[0],
                   preferred_element_type=jnp.float32) + bo_ref[0]

    x2 = _layer_norm(x2 + attn, ln1w_ref[0], ln1b_ref[0], eps)
    h1 = jnp.maximum(
        jnp.dot(x2.astype(bf16), w1_ref[0],
                preferred_element_type=jnp.float32) + b1_ref[0], 0.0)
    ff = jnp.dot(h1.astype(bf16), w2_ref[0],
                 preferred_element_type=jnp.float32) + b2_ref[0]
    x2 = _layer_norm(x2 + ff, ln2w_ref[0], ln2b_ref[0], eps)

    x_ref[...] = x2.reshape(CB, A, D)             # stays resident in VMEM

    # -------- epilogue (last layer): per-C-block partial sum over columns ----
    @pl.when(layer == n_layers - 1)
    def _():
        psum_ref[...] = jnp.sum(x2.reshape(CB, A, D), axis=0, keepdims=True)


def head_epilogue_kernel(psum_ref, cond_ref, mw1_ref, mb1_ref, mw2_ref, mb2_ref,
                         lw_ref, lb_ref, out_ref, *, inv_cp1):
    # mean(cat([enc, meta], dim=1) @ W + b, dim=1)
    #   == ((sum_c enc + meta) / (C+1)) @ W + b        (exact algebraic fold)
    enc = jnp.sum(psum_ref[...], axis=0)                                  # [A, D]
    meta = jnp.maximum(
        jnp.dot(cond_ref[...], mw1_ref[...],
                preferred_element_type=jnp.float32) + mb1_ref[...], 0.0)
    meta = jnp.maximum(
        jnp.dot(meta, mw2_ref[...],
                preferred_element_type=jnp.float32) + mb2_ref[...], 0.0)  # [A, D]
    pooled = (enc + meta) * inv_cp1
    out_ref[...] = jnp.dot(pooled, lw_ref[...],
                           preferred_element_type=jnp.float32) + lb_ref[...]


# ----------------------------- wrapper ---------------------------------------


def transformer_forward(src, cond, params, *, nhead):
    A, L, C = src.shape
    emb_w = params['embedding']
    D = emb_w.shape[1]
    layers = params['layers']
    NL = len(layers)
    d_hid = layers[0]['w1'].shape[1]
    O = params['lw'].shape[1]
    emb_scale = float(math.sqrt(D))
    bf16 = jnp.bfloat16

    # ---- XLA-side glue: embedding gather + pooling over L + pos-enc mean ----
    # TODO(synk): the data-dependent token gather stays in XLA; only the pooled
    # [C, A, D] tensor enters the kernel (cuts resident VMEM by (L-1)/L).
    src_t = jnp.transpose(src, (2, 1, 0))                  # [C, L, A]
    emb = emb_w[src_t]                                     # [C, L, A, D]
    pe_mean = jnp.mean(params['pe'][:L], axis=0)           # [D]
    x0 = jnp.mean(emb, axis=1) * emb_scale + pe_mean       # [C, A, D]

    idx = jnp.arange(A)
    mask = jnp.where(idx[None, :] > idx[:, None], _NEG_INF, 0.0).astype(jnp.float32)

    # ---- stack per-layer weights (bf16 matmul operands, f32 biases/LN) ----
    wqkv = jnp.stack([jnp.concatenate([lp['wq'], lp['wk'], lp['wv']], axis=1)
                      for lp in layers]).astype(bf16)                    # [NL, D, 3D]
    bqkv = jnp.stack([jnp.concatenate([lp['bq'], lp['bk'], lp['bv']], axis=1)
                      for lp in layers])                                 # [NL, 1, 3D]
    wo = jnp.stack([lp['wo'] for lp in layers]).astype(bf16)
    bo = jnp.stack([lp['bo'] for lp in layers])
    ln1w = jnp.stack([lp['ln1w'] for lp in layers])
    ln1b = jnp.stack([lp['ln1b'] for lp in layers])
    w1 = jnp.stack([lp['w1'] for lp in layers]).astype(bf16)
    b1 = jnp.stack([lp['b1'] for lp in layers])
    w2 = jnp.stack([lp['w2'] for lp in layers]).astype(bf16)
    b2 = jnp.stack([lp['b2'] for lp in layers])
    ln2w = jnp.stack([lp['ln2w'] for lp in layers])
    ln2b = jnp.stack([lp['ln2b'] for lp in layers])

    # ---- block the batch columns: 2 blocks -> v7x's two TensorCores ----
    if C % 2 == 0 and C >= 2:
        NCB, CB = 2, C // 2
    else:
        NCB, CB = 1, C

    def const_spec(shape):
        zeros = (0,) * len(shape)
        return pl.BlockSpec(shape, lambda cb, l, z=zeros: z)

    def layer_spec(shape):
        return pl.BlockSpec((1,) + shape,
                            lambda cb, l, n=len(shape): (l,) + (0,) * n)

    in_specs = [
        pl.BlockSpec((CB, A, D), lambda cb, l: (cb, 0, 0)),   # pooled input, C-blocked
        const_spec((A, A)),                                   # causal mask
        layer_spec((D, 3 * D)), layer_spec((1, 3 * D)),       # wqkv, bqkv
        layer_spec((D, D)), layer_spec((1, D)),               # wo, bo
        layer_spec((1, D)), layer_spec((1, D)),               # ln1w, ln1b
        layer_spec((D, d_hid)), layer_spec((1, d_hid)),       # w1, b1
        layer_spec((d_hid, D)), layer_spec((1, D)),           # w2, b2
        layer_spec((1, D)), layer_spec((1, D)),               # ln2w, ln2b
    ]

    # ---- VMEM budget: double-buffered blocks + scratch + working set ----
    layer_arrs = (wqkv, bqkv, wo, bo, ln1w, ln1b, w1, b1, w2, b2, ln2w, ln2b)
    per_layer = sum(int(a.size) * a.dtype.itemsize for a in layer_arrs) // NL
    resident = CB * A * D * 4 + A * A * 4 + A * D * 4
    work = CB * A * (3 * D + d_hid + 3 * A) * 4
    est = 2 * (per_layer + resident) + CB * A * D * 4 + 2 * work + (2 << 20)
    vmem_limit = int(min(64 << 20, max(32 << 20, est)))      # cap for v7x's 64 MiB

    psum = pl.pallas_call(
        functools.partial(encoder_layers_kernel, nhead=nhead, eps=1e-5),
        out_shape=jax.ShapeDtypeStruct((NCB, A, D), jnp.float32),
        grid=(NCB, NL),
        in_specs=in_specs,
        out_specs=pl.BlockSpec((1, A, D), lambda cb, l: (cb, 0, 0)),
        scratch_shapes=[pltpu.VMEM((CB, A, D), jnp.float32)],
        compiler_params=pltpu.CompilerParams(
            dimension_semantics=("parallel", "arbitrary"),
            vmem_limit_bytes=vmem_limit),
    )(x0, mask, wqkv, bqkv, wo, bo, ln1w, ln1b, w1, b1, w2, b2, ln2w, ln2b)

    # tiny single-shot epilogue kernel: cross-column sum + meta MLP + Linear (+mean fold)
    out = pl.pallas_call(
        functools.partial(head_epilogue_kernel, inv_cp1=1.0 / (C + 1)),
        out_shape=jax.ShapeDtypeStruct((A, O), jnp.float32),
    )(psum, cond, params['mw1'], params['mb1'], params['mw2'], params['mb2'],
      params['lw'], params['lb'])
    return out


# ----------------------------- pure-JAX reference ------------------------------


def _ref_ln(x, w, b, eps=1e-5):
    mu = jnp.mean(x, axis=-1, keepdims=True)
    var = jnp.mean((x - mu) ** 2, axis=-1, keepdims=True)
    return (x - mu) / jnp.sqrt(var + eps) * w + b


def _ref_encoder_layer(x, mask, p, *, nhead):
    S, B, D = x.shape
    hd = D // nhead
    q = (jnp.einsum('sbd,de->sbe', x, p['wq']) + p['bq']).reshape(S, B, nhead, hd)
    k = (jnp.einsum('sbd,de->sbe', x, p['wk']) + p['bk']).reshape(S, B, nhead, hd)
    v = (jnp.einsum('sbd,de->sbe', x, p['wv']) + p['bv']).reshape(S, B, nhead, hd)
    scores = jnp.einsum('sbhe,tbhe->bhst', q, k) / math.sqrt(hd) + mask[None, None]
    w = jax.nn.softmax(scores, axis=-1)
    attn = jnp.einsum('bhst,tbhe->sbhe', w, v).reshape(S, B, D)
    attn = jnp.einsum('sbd,de->sbe', attn, p['wo']) + p['bo']
    x = _ref_ln(x + attn, p['ln1w'], p['ln1b'])
    ff = jnp.maximum(jnp.einsum('sbd,dh->sbh', x, p['w1']) + p['b1'], 0.0)
    ff = jnp.einsum('sbh,hd->sbd', ff, p['w2']) + p['b2']
    return _ref_ln(x + ff, p['ln2w'], p['ln2b'])


def reference_forward(src, cond, params, *, nhead):
    emb_w, pe = params['embedding'], params['pe']
    D = emb_w.shape[1]
    x = emb_w[src] * math.sqrt(D)                    # [A, L, C, D]
    x = x + pe[None, :, None, :]                     # positional encoding over L
    x = jnp.mean(x, axis=1)                          # [A, C, D]
    A = x.shape[0]
    idx = jnp.arange(A)
    mask = jnp.where(idx[None, :] > idx[:, None], _NEG_INF, 0.0).astype(jnp.float32)
    for p in params['layers']:
        x = _ref_encoder_layer(x, mask, p, nhead=nhead)
    meta = jnp.maximum(cond @ params['mw1'] + params['mb1'], 0.0)
    meta = jnp.maximum(meta @ params['mw2'] + params['mb2'], 0.0)
    out = jnp.concatenate([x, meta[:, None, :]], axis=1)
    out = out @ params['lw'] + params['lb']
    return jnp.mean(out, axis=1)


# ----------------------------- params ------------------------------------------


def make_params(key, *, ntoken, d_model, nhead, d_hid, nlayers, meta_dim,
                output_dim, max_len):
    keys = iter(jax.random.split(key, 16 + 14 * nlayers))

    def u(shape, s=0.1):
        return jax.random.uniform(next(keys), shape, jnp.float32, -s, s)

    params = {'embedding': u((ntoken, d_model))}

    position = jnp.arange(max_len, dtype=jnp.float32)[:, None]
    div_term = jnp.exp(jnp.arange(0, d_model, 2, dtype=jnp.float32)
                       * (-math.log(10000.0) / d_model))
    pe = jnp.zeros((max_len, d_model), jnp.float32)
    pe = pe.at[:, 0::2].set(jnp.sin(position * div_term))
    pe = pe.at[:, 1::2].set(jnp.cos(position * div_term))
    params['pe'] = pe

    layers = []
    for _ in range(nlayers):
        layers.append(dict(
            wq=u((d_model, d_model)), wk=u((d_model, d_model)), wv=u((d_model, d_model)),
            bq=u((1, d_model)), bk=u((1, d_model)), bv=u((1, d_model)),
            wo=u((d_model, d_model)), bo=u((1, d_model)),
            ln1w=jnp.ones((1, d_model), jnp.float32),
            ln1b=jnp.zeros((1, d_model), jnp.float32),
            w1=u((d_model, d_hid)), b1=u((1, d_hid)),
            w2=u((d_hid, d_model)), b2=u((1, d_model)),
            ln2w=jnp.ones((1, d_model), jnp.float32),
            ln2b=jnp.zeros((1, d_model), jnp.float32),
        ))
    params['layers'] = layers
    params['mw1'] = u((meta_dim, 2 * meta_dim)); params['mb1'] = u((1, 2 * meta_dim))
    params['mw2'] = u((2 * meta_dim, d_model)); params['mb2'] = u((1, d_model))
    params['lw'] = u((d_model, output_dim))
    params['lb'] = jnp.zeros((1, output_dim), jnp.float32)
    return params


# ----------------------------- main ---------------------------------------------


if __name__ == "__main__":
    # small shapes consistent with the module's forward
    A, L, C = 8, 8, 4                  # src: [A, L(=max_len), C] int tokens
    ntoken, d_model = 32, 32
    nhead, d_hid, nlayers = 4, 64, 2
    meta_dim, output_dim = 8, 8

    root = jax.random.PRNGKey(0)
    kp, ks, kc = jax.random.split(root, 3)
    params = make_params(kp, ntoken=ntoken, d_model=d_model, nhead=nhead,
                         d_hid=d_hid, nlayers=nlayers, meta_dim=meta_dim,
                         output_dim=output_dim, max_len=L)
    src = jax.random.randint(ks, (A, L, C), 0, ntoken, dtype=jnp.int32)
    cond = jax.random.uniform(kc, (A, meta_dim), jnp.float32, minval=-1.0, maxval=1.0)

    fwd = jax.jit(functools.partial(transformer_forward, nhead=nhead))
    out = fwd(src, cond, params)
    out = jax.block_until_ready(out)

    ref = reference_forward(src, cond, params, nhead=nhead)
    assert out.shape == (A, output_dim)
    assert bool(jnp.all(jnp.isfinite(out)))
    assert float(jnp.max(jnp.abs(out - ref))) < 5e-2

    # TODO(synk): dropout layers use eval-mode (identity) semantics; no stochastic
    # dropout masks are generated in-kernel.
    # TODO(synk): d_model / d_hid / output_dim are not padded to multiples of 128
    # here (padding d_model is not LayerNorm-transparent); at production sizes pick
    # dims that are already 128-aligned for lane-dense vreg/MXU utilization.
    print("KERNEL_OK")
</pallas_src>

<mosaic_0001>
module attributes {stable_mosaic.version = 11 : i64} {
  func.func @head_epilogue_kernel(%arg0: memref<2x8x32xf32, #tpu.memory_space<vmem>>, %arg1: memref<8x8xf32, #tpu.memory_space<vmem>>, %arg2: memref<8x16xf32, #tpu.memory_space<vmem>>, %arg3: memref<1x16xf32, #tpu.memory_space<vmem>>, %arg4: memref<16x32xf32, #tpu.memory_space<vmem>>, %arg5: memref<1x32xf32, #tpu.memory_space<vmem>>, %arg6: memref<32x8xf32, #tpu.memory_space<vmem>>, %arg7: memref<1x8xf32, #tpu.memory_space<vmem>>, %arg8: memref<8x8xf32, #tpu.memory_space<vmem>>) attributes {dimension_semantics = [], scalar_prefetch = 0 : i64, scratch_operands = 0 : i64, tpu.core_type = #tpu.core_type<tc>} {
    %c0 = arith.constant 0 : index
    %c0_0 = arith.constant 0 : index
    %c0_1 = arith.constant 0 : index
    %0 = vector.load %arg0[%c0, %c0_0, %c0_1] : memref<2x8x32xf32, #tpu.memory_space<vmem>>, vector<2x8x32xf32>
    %cst = arith.constant dense<0.000000e+00> : vector<8x32xf32>
    %1 = vector.multi_reduction <add>, %0, %cst [0] : vector<2x8x32xf32> to vector<8x32xf32>
    %c0_2 = arith.constant 0 : index
    %c0_3 = arith.constant 0 : index
    %2 = vector.load %arg1[%c0_2, %c0_3] : memref<8x8xf32, #tpu.memory_space<vmem>>, vector<8x8xf32>
    %c0_4 = arith.constant 0 : index
    %c0_5 = arith.constant 0 : index
    %3 = vector.load %arg2[%c0_4, %c0_5] : memref<8x16xf32, #tpu.memory_space<vmem>>, vector<8x16xf32>
    %cst_6 = arith.constant dense<0.000000e+00> : vector<8x16xf32>
    %4 = tpu.matmul %2, %3, %cst_6 {dimension_numbers = #tpu.dot_dimension_numbers<[1], [0], [0], [1], [0, 0, 1, 1], [], []>} : vector<8x8xf32>, vector<8x16xf32>, vector<8x16xf32> -> vector<8x16xf32>
    %c0_7 = arith.constant 0 : index
    %c0_8 = arith.constant 0 : index
    %5 = vector.load %arg3[%c0_7, %c0_8] : memref<1x16xf32, #tpu.memory_space<vmem>>, vector<1x16xf32>
    %6 = vector.broadcast %5 : vector<1x16xf32> to vector<8x16xf32>
    %7 = arith.addf %4, %6 : vector<8x16xf32>
    %cst_9 = arith.constant 0.000000e+00 : f32
    %8 = vector.broadcast %cst_9 : f32 to vector<8x16xf32>
    %9 = arith.maximumf %7, %8 : vector<8x16xf32>
    %c0_10 = arith.constant 0 : index
    %c0_11 = arith.constant 0 : index
    %10 = vector.load %arg4[%c0_10, %c0_11] : memref<16x32xf32, #tpu.memory_space<vmem>>, vector<16x32xf32>
    %cst_12 = arith.constant dense<0.000000e+00> : vector<8x32xf32>
    %11 = tpu.matmul %9, %10, %cst_12 {dimension_numbers = #tpu.dot_dimension_numbers<[1], [0], [0], [1], [0, 0, 1, 1], [], []>} : vector<8x16xf32>, vector<16x32xf32>, vector<8x32xf32> -> vector<8x32xf32>
    %c0_13 = arith.constant 0 : index
    %c0_14 = arith.constant 0 : index
    %12 = vector.load %arg5[%c0_13, %c0_14] : memref<1x32xf32, #tpu.memory_space<vmem>>, vector<1x32xf32>
    %13 = vector.broadcast %12 : vector<1x32xf32> to vector<8x32xf32>
    %14 = arith.addf %11, %13 : vector<8x32xf32>
    %cst_15 = arith.constant 0.000000e+00 : f32
    %15 = vector.broadcast %cst_15 : f32 to vector<8x32xf32>
    %16 = arith.maximumf %14, %15 : vector<8x32xf32>
    %17 = arith.addf %1, %16 : vector<8x32xf32>
    %cst_16 = arith.constant 2.000000e-01 : f32
    %18 = vector.broadcast %cst_16 : f32 to vector<8x32xf32>
    %19 = arith.mulf %17, %18 : vector<8x32xf32>
    %c0_17 = arith.constant 0 : index
    %c0_18 = arith.constant 0 : index
    %20 = vector.load %arg6[%c0_17, %c0_18] : memref<32x8xf32, #tpu.memory_space<vmem>>, vector<32x8xf32>
    %cst_19 = arith.constant dense<0.000000e+00> : vector<8x8xf32>
    %21 = tpu.matmul %19, %20, %cst_19 {dimension_numbers = #tpu.dot_dimension_numbers<[1], [0], [0], [1], [0, 0, 1, 1], [], []>} : vector<8x32xf32>, vector<32x8xf32>, vector<8x8xf32> -> vector<8x8xf32>
    %c0_20 = arith.constant 0 : index
    %c0_21 = arith.constant 0 : index
    %22 = vector.load %arg7[%c0_20, %c0_21] : memref<1x8xf32, #tpu.memory_space<vmem>>, vector<1x8xf32>
    %23 = vector.broadcast %22 : vector<1x8xf32> to vector<8x8xf32>
    %24 = arith.addf %21, %23 : vector<8x8xf32>
    %c0_22 = arith.constant 0 : index
    %c0_23 = arith.constant 0 : index
    %25 = vector.load %arg8[%c0_22, %c0_23] : memref<8x8xf32, #tpu.memory_space<vmem>>, vector<8x8xf32>
    tpu.vector_store %arg8[%c0_22, %c0_23], %24 {strides = array<i32>} : memref<8x8xf32, #tpu.memory_space<vmem>>, vector<8x8xf32>,
    return
  }
}

module attributes {stable_mosaic.version = 11 : i64} {
  func.func @encoder_layers_kernel(%arg0: i32, %arg1: i32, %arg2: memref<2x8x32xf32, #tpu.memory_space<vmem>>, %arg3: memref<8x8xf32, #tpu.memory_space<vmem>>, %arg4: memref<1x32x96xbf16, #tpu.memory_space<vmem>>, %arg5: memref<1x1x96xf32, #tpu.memory_space<vmem>>, %arg6: memref<1x32x32xbf16, #tpu.memory_space<vmem>>, %arg7: memref<1x1x32xf32, #tpu.memory_space<vmem>>, %arg8: memref<1x1x32xf32, #tpu.memory_space<vmem>>, %arg9: memref<1x1x32xf32, #tpu.memory_space<vmem>>, %arg10: memref<1x32x64xbf16, #tpu.memory_space<vmem>>, %arg11: memref<1x1x64xf32, #tpu.memory_space<vmem>>, %arg12: memref<1x64x32xbf16, #tpu.memory_space<vmem>>, %arg13: memref<1x1x32xf32, #tpu.memory_space<vmem>>, %arg14: memref<1x1x32xf32, #tpu.memory_space<vmem>>, %arg15: memref<1x1x32xf32, #tpu.memory_space<vmem>>, %arg16: memref<1x8x32xf32, #tpu.memory_space<vmem>>, %arg17: memref<2x8x32xf32, #tpu.memory_space<vmem>>) attributes {dimension_semantics = [#tpu.dimension_semantics<parallel>, #tpu.dimension_semantics<arbitrary>], iteration_bounds = array<i64: 2, 2>, scalar_prefetch = 0 : i64, scratch_operands = 1 : i64, tpu.core_type = #tpu.core_type<tc>, window_params = [{transform_indices = @transform_0, window_bounds = array<i64: 2, 8, 32>}, {pipeline_mode = #tpu.pipeline_mode<synchronous>, transform_indices = @transform_1, window_bounds = array<i64: 8, 8>}, {transform_indices = @transform_2, window_bounds = array<i64: 1, 32, 96>}, {transform_indices = @transform_3, window_bounds = array<i64: 1, 1, 96>}, {transform_indices = @transform_4, window_bounds = array<i64: 1, 32, 32>}, {transform_indices = @transform_5, window_bounds = array<i64: 1, 1, 32>}, {transform_indices = @transform_6, window_bounds = array<i64: 1, 1, 32>}, {transform_indices = @transform_7, window_bounds = array<i64: 1, 1, 32>}, {transform_indices = @transform_8, window_bounds = array<i64: 1, 32, 64>}, {transform_indices = @transform_9, window_bounds = array<i64: 1, 1, 64>}, {transform_indices = @transform_10, window_bounds = array<i64: 1, 64, 32>}, {transform_indices = @transform_11, window_bounds = array<i64: 1, 1, 32>}, {transform_indices = @transform_12, window_bounds = array<i64: 1, 1, 32>}, {transform_indices = @transform_13, window_bounds = array<i64: 1, 1, 32>}, {transform_indices = @transform_14, window_bounds = array<i64: 1, 8, 32>}]} {
    %c0_i32 = arith.constant 0 : i32
    %0 = arith.cmpi eq, %arg1, %c0_i32 : i32
    %1 = arith.extui %0 : i1 to i32
    %c0_i32_0 = arith.constant 0 : i32
    %2 = arith.cmpi ne, %1, %c0_i32_0 : i32
    scf.if %2 {
      %c0_76 = arith.constant 0 : index
      %c0_77 = arith.constant 0 : index
      %c0_78 = arith.constant 0 : index
      %178 = vector.load %arg2[%c0_76, %c0_77, %c0_78] : memref<2x8x32xf32, #tpu.memory_space<vmem>>, vector<2x8x32xf32>
      %c0_79 = arith.constant 0 : index
      %c0_80 = arith.constant 0 : index
      %c0_81 = arith.constant 0 : index
      %179 = vector.load %arg17[%c0_79, %c0_80, %c0_81] : memref<2x8x32xf32, #tpu.memory_space<vmem>>, vector<2x8x32xf32>
      tpu.vector_store %arg17[%c0_79, %c0_80, %c0_81], %178 {strides = array<i32>} : memref<2x8x32xf32, #tpu.memory_space<vmem>>, vector<2x8x32xf32>,
    } else {
    }
    %c0 = arith.constant 0 : index
    %c0_1 = arith.constant 0 : index
    %c0_2 = arith.constant 0 : index
    %3 = vector.load %arg17[%c0, %c0_1, %c0_2] : memref<2x8x32xf32, #tpu.memory_space<vmem>>, vector<2x8x32xf32>
    %4 = vector.shape_cast %3 : vector<2x8x32xf32> to vector<16x32xf32>
    %5 = arith.truncf %4 : vector<16x32xf32> to vector<16x32xbf16>
    %c0_3 = arith.constant 0 : index
    %c0_4 = arith.constant 0 : index
    %c0_5 = arith.constant 0 : index
    %6 = vector.load %arg4[%c0_3, %c0_4, %c0_5] : memref<1x32x96xbf16, #tpu.memory_space<vmem>>, vector<1x32x96xbf16>
    %7 = vector.shape_cast %6 : vector<1x32x96xbf16> to vector<32x96xbf16>
    %cst = arith.constant dense<0.000000e+00> : vector<16x96xf32>
    %8 = tpu.matmul %5, %7, %cst {dimension_numbers = #tpu.dot_dimension_numbers<[1], [0], [0], [1], [0, 0, 1, 1], [], []>} : vector<16x32xbf16>, vector<32x96xbf16>, vector<16x96xf32> -> vector<16x96xf32>
    %c0_6 = arith.constant 0 : index
    %c0_7 = arith.constant 0 : index
    %c0_8 = arith.constant 0 : index
    %9 = vector.load %arg5[%c0_6, %c0_7, %c0_8] : memref<1x1x96xf32, #tpu.memory_space<vmem>>, vector<1x1x96xf32>
    %10 = vector.shape_cast %9 : vector<1x1x96xf32> to vector<1x96xf32>
    %11 = vector.broadcast %10 : vector<1x96xf32> to vector<16x96xf32>
    %12 = arith.addf %8, %11 : vector<16x96xf32>
    %13 = vector.extract_strided_slice %12 {offsets = [0, 0], sizes = [16, 32], strides = [1, 1]} : vector<16x96xf32> to vector<16x32xf32>
    %cst_9 = arith.constant 0.353553385 : f32
    %14 = vector.broadcast %cst_9 : f32 to vector<16x32xf32>
    %15 = arith.mulf %13, %14 : vector<16x32xf32>
    %16 = arith.truncf %15 : vector<16x32xf32> to vector<16x32xbf16>
    %17 = vector.shape_cast %16 : vector<16x32xbf16> to vector<2x8x32xbf16>
    %18 = vector.extract_strided_slice %12 {offsets = [0, 32], sizes = [16, 32], strides = [1, 1]} : vector<16x96xf32> to vector<16x32xf32>
    %19 = arith.truncf %18 : vector<16x32xf32> to vector<16x32xbf16>
    %20 = vector.shape_cast %19 : vector<16x32xbf16> to vector<2x8x32xbf16>
    %21 = vector.extract_strided_slice %12 {offsets = [0, 64], sizes = [16, 32], strides = [1, 1]} : vector<16x96xf32> to vector<16x32xf32>
    %22 = arith.truncf %21 : vector<16x32xf32> to vector<16x32xbf16>
    %23 = vector.shape_cast %22 : vector<16x32xbf16> to vector<2x8x32xbf16>
    %c0_10 = arith.constant 0 : index
    %c0_11 = arith.constant 0 : index
    %24 = vector.load %arg3[%c0_10, %c0_11] : memref<8x8xf32, #tpu.memory_space<vmem>>, vector<8x8xf32>
    %25 = vector.shape_cast %24 : vector<8x8xf32> to vector<1x8x8xf32>
    %26 = vector.broadcast %25 : vector<1x8x8xf32> to vector<2x8x8xf32>
    %27 = vector.extract_strided_slice %17 {offsets = [0, 0, 0], sizes = [2, 8, 8], strides = [1, 1, 1]} : vector<2x8x32xbf16> to vector<2x8x8xbf16>
    %28 = vector.extract_strided_slice %20 {offsets = [0, 0, 0], sizes = [2, 8, 8], strides = [1, 1, 1]} : vector<2x8x32xbf16> to vector<2x8x8xbf16>
    "tpu.trace_start"() <{level = 10 : i32, message = "cqe,cke->cqk"}> : () -> ()
    %cst_12 = arith.constant dense<0.000000e+00> : vector<2x8x8xf32>
    %29 = tpu.matmul %27, %28, %cst_12 {dimension_numbers = #tpu.dot_dimension_numbers<[2], [2], [1], [1], [0, 0, 0, 1, 1, 1], [0], [0]>} : vector<2x8x8xbf16>, vector<2x8x8xbf16>, vector<2x8x8xf32> -> vector<2x8x8xf32>
    "tpu.trace_stop"() : () -> ()
    %30 = arith.addf %29, %26 : vector<2x8x8xf32>
    %cst_13 = arith.constant dense<0xFF800000> : vector<2x8xf32>
    %31 = vector.multi_reduction <maximumf>, %30, %cst_13 [2] : vector<2x8x8xf32> to vector<2x8xf32>
    %32 = vector.shape_cast %31 : vector<2x8xf32> to vector<2x8x1xf32>
    %33 = vector.broadcast %32 : vector<2x8x1xf32> to vector<2x8x8xf32>
    %34 = arith.subf %30, %33 : vector<2x8x8xf32>
    %35 = math.exp %34 : vector<2x8x8xf32>
    %cst_14 = arith.constant dense<0.000000e+00> : vector<2x8xf32>
    %36 = vector.multi_reduction <add>, %35, %cst_14 [2] : vector<2x8x8xf32> to vector<2x8xf32>
    %37 = vector.shape_cast %36 : vector<2x8xf32> to vector<2x8x1xf32>
    %38 = tpu.reciprocal %37 {approx = true} : vector<2x8x1xf32> -> vector<2x8x1xf32>
    %39 = vector.broadcast %38 : vector<2x8x1xf32> to vector<2x8x8xf32>
    %40 = arith.mulf %35, %39 : vector<2x8x8xf32>
    %41 = arith.truncf %40 : vector<2x8x8xf32> to vector<2x8x8xbf16>
    %42 = vector.extract_strided_slice %23 {offsets = [0, 0, 0], sizes = [2, 8, 8], strides = [1, 1, 1]} : vector<2x8x32xbf16> to vector<2x8x8xbf16>
    "tpu.trace_start"() <{level = 10 : i32, message = "cqk,cke->cqe"}> : () -> ()
    %cst_15 = arith.constant dense<0.000000e+00> : vector<2x8x8xf32>
    %43 = tpu.matmul %41, %42, %cst_15 {dimension_numbers = #tpu.dot_dimension_numbers<[2], [1], [1], [2], [0, 0, 0, 1, 1, 2], [0], [0]>} : vector<2x8x8xbf16>, vector<2x8x8xbf16>, vector<2x8x8xf32> -> vector<2x8x8xf32>
    "tpu.trace_stop"() : () -> ()
    %44 = vector.extract_strided_slice %17 {offsets = [0, 0, 8], sizes = [2, 8, 8], strides = [1, 1, 1]} : vector<2x8x32xbf16> to vector<2x8x8xbf16>
    %45 = vector.extract_strided_slice %20 {offsets = [0, 0, 8], sizes = [2, 8, 8], strides = [1, 1, 1]} : vector<2x8x32xbf16> to vector<2x8x8xbf16>
    "tpu.trace_start"() <{level = 10 : i32, message = "cqe,cke->cqk"}> : () -> ()
    %cst_16 = arith.constant dense<0.000000e+00> : vector<2x8x8xf32>
    %46 = tpu.matmul %44, %45, %cst_16 {dimension_numbers = #tpu.dot_dimension_numbers<[2], [2], [1], [1], [0, 0, 0, 1, 1, 1], [0], [0]>} : vector<2x8x8xbf16>, vector<2x8x8xbf16>, vector<2x8x8xf32> -> vector<2x8x8xf32>
    "tpu.trace_stop"() : () -> ()
    %47 = arith.addf %46, %26 : vector<2x8x8xf32>
    %cst_17 = arith.constant dense<0xFF800000> : vector<2x8xf32>
    %48 = vector.multi_reduction <maximumf>, %47, %cst_17 [2] : vector<2x8x8xf32> to vector<2x8xf32>
    %49 = vector.shape_cast %48 : vector<2x8xf32> to vector<2x8x1xf32>
    %50 = vector.broadcast %49 : vector<2x8x1xf32> to vector<2x8x8xf32>
    %51 = arith.subf %47, %50 : vector<2x8x8xf32>
    %52 = math.exp %51 : vector<2x8x8xf32>
    %cst_18 = arith.constant dense<0.000000e+00> : vector<2x8xf32>
    %53 = vector.multi_reduction <add>, %52, %cst_18 [2] : vector<2x8x8xf32> to vector<2x8xf32>
    %54 = vector.shape_cast %53 : vector<2x8xf32> to vector<2x8x1xf32>
    %55 = tpu.reciprocal %54 {approx = true} : vector<2x8x1xf32> -> vector<2x8x1xf32>
    %56 = vector.broadcast %55 : vector<2x8x1xf32> to vector<2x8x8xf32>
    %57 = arith.mulf %52, %56 : vector<2x8x8xf32>
    %58 = arith.truncf %57 : vector<2x8x8xf32> to vector<2x8x8xbf16>
    %59 = vector.extract_strided_slice %23 {offsets = [0, 0, 8], sizes = [2, 8, 8], strides = [1, 1, 1]} : vector<2x8x32xbf16> to vector<2x8x8xbf16>
    "tpu.trace_start"() <{level = 10 : i32, message = "cqk,cke->cqe"}> : () -> ()
    %cst_19 = arith.constant dense<0.000000e+00> : vector<2x8x8xf32>
    %60 = tpu.matmul %58, %59, %cst_19 {dimension_numbers = #tpu.dot_dimension_numbers<[2], [1], [1], [2], [0, 0, 0, 1, 1, 2], [0], [0]>} : vector<2x8x8xbf16>, vector<2x8x8xbf16>, vector<2x8x8xf32> -> vector<2x8x8xf32>
    "tpu.trace_stop"() : () -> ()
    %61 = vector.extract_strided_slice %17 {offsets = [0, 0, 16], sizes = [2, 8, 8], strides = [1, 1, 1]} : vector<2x8x32xbf16> to vector<2x8x8xbf16>
    %62 = vector.extract_strided_slice %20 {offsets = [0, 0, 16], sizes = [2, 8, 8], strides = [1, 1, 1]} : vector<2x8x32xbf16> to vector<2x8x8xbf16>
    "tpu.trace_start"() <{level = 10 : i32, message = "cqe,cke->cqk"}> : () -> ()
    %cst_20 = arith.constant dense<0.000000e+00> : vector<2x8x8xf32>
    %63 = tpu.matmul %61, %62, %cst_20 {dimension_numbers = #tpu.dot_dimension_numbers<[2], [2], [1], [1], [0, 0, 0, 1, 1, 1], [0], [0]>} : vector<2x8x8xbf16>, vector<2x8x8xbf16>, vector<2x8x8xf32> -> vector<2x8x8xf32>
    "tpu.trace_stop"() : () -> ()
    %64 = arith.addf %63, %26 : vector<2x8x8xf32>
    %cst_21 = arith.constant dense<0xFF800000> : vector<2x8xf32>
    %65 = vector.multi_reduction <maximumf>, %64, %cst_21 [2] : vector<2x8x8xf32> to vector<2x8xf32>
    %66 = vector.shape_cast %65 : vector<2x8xf32> to vector<2x8x1xf32>
    %67 = vector.broadcast %66 : vector<2x8x1xf32> to vector<2x8x8xf32>
    %68 = arith.subf %64, %67 : vector<2x8x8xf32>
    %69 = math.exp %68 : vector<2x8x8xf32>
    %cst_22 = arith.constant dense<0.000000e+00> : vector<2x8xf32>
    %70 = vector.multi_reduction <add>, %69, %cst_22 [2] : vector<2x8x8xf32> to vector<2x8xf32>
    %71 = vector.shape_cast %70 : vector<2x8xf32> to vector<2x8x1xf32>
    %72 = tpu.reciprocal %71 {approx = true} : vector<2x8x1xf32> -> vector<2x8x1xf32>
    %73 = vector.broadcast %72 : vector<2x8x1xf32> to vector<2x8x8xf32>
    %74 = arith.mulf %69, %73 : vector<2x8x8xf32>
    %75 = arith.truncf %74 : vector<2x8x8xf32> to vector<2x8x8xbf16>
    %76 = vector.extract_strided_slice %23 {offsets = [0, 0, 16], sizes = [2, 8, 8], strides = [1, 1, 1]} : vector<2x8x32xbf16> to vector<2x8x8xbf16>
    "tpu.trace_start"() <{level = 10 : i32, message = "cqk,cke->cqe"}> : () -> ()
    %cst_23 = arith.constant dense<0.000000e+00> : vector<2x8x8xf32>
    %77 = tpu.matmul %75, %76, %cst_23 {dimension_numbers = #tpu.dot_dimension_numbers<[2], [1], [1], [2], [0, 0, 0, 1, 1, 2], [0], [0]>} : vector<2x8x8xbf16>, vector<2x8x8xbf16>, vector<2x8x8xf32> -> vector<2x8x8xf32>
    "tpu.trace_stop"() : () -> ()
    %78 = vector.extract_strided_slice %17 {offsets = [0, 0, 24], sizes = [2, 8, 8], strides = [1, 1, 1]} : vector<2x8x32xbf16> to vector<2x8x8xbf16>
    %79 = vector.extract_strided_slice %20 {offsets = [0, 0, 24], sizes = [2, 8, 8], strides = [1, 1, 1]} : vector<2x8x32xbf16> to vector<2x8x8xbf16>
    "tpu.trace_start"() <{level = 10 : i32, message = "cqe,cke->cqk"}> : () -> ()
    %cst_24 = arith.constant dense<0.000000e+00> : vector<2x8x8xf32>
    %80 = tpu.matmul %78, %79, %cst_24 {dimension_numbers = #tpu.dot_dimension_numbers<[2], [2], [1], [1], [0, 0, 0, 1, 1, 1], [0], [0]>} : vector<2x8x8xbf16>, vector<2x8x8xbf16>, vector<2x8x8xf32> -> vector<2x8x8xf32>
    "tpu.trace_stop"() : () -> ()
    %81 = arith.addf %80, %26 : vector<2x8x8xf32>
    %cst_25 = arith.constant dense<0xFF800000> : vector<2x8xf32>
    %82 = vector.multi_reduction <maximumf>, %81, %cst_25 [2] : vector<2x8x8xf32> to vector<2x8xf32>
    %83 = vector.shape_cast %82 : vector<2x8xf32> to vector<2x8x1xf32>
    %84 = vector.broadcast %83 : vector<2x8x1xf32> to vector<2x8x8xf32>
    %85 = arith.subf %81, %84 : vector<2x8x8xf32>
    %86 = math.exp %85 : vector<2x8x8xf32>
    %cst_26 = arith.constant dense<0.000000e+00> : vector<2x8xf32>
    %87 = vector.multi_reduction <add>, %86, %cst_26 [2] : vector<2x8x8xf32> to vector<2x8xf32>
    %88 = vector.shape_cast %87 : vector<2x8xf32> to vector<2x8x1xf32>
    %89 = tpu.reciprocal %88 {approx = true} : vector<2x8x1xf32> -> vector<2x8x1xf32>
    %90 = vector.broadcast %89 : vector<2x8x1xf32> to vector<2x8x8xf32>
    %91 = arith.mulf %86, %90 : vector<2x8x8xf32>
    %92 = arith.truncf %91 : vector<2x8x8xf32> to vector<2x8x8xbf16>
    %93 = vector.extract_strided_slice %23 {offsets = [0, 0, 24], sizes = [2, 8, 8], strides = [1, 1, 1]} : vector<2x8x32xbf16> to vector<2x8x8xbf16>
    "tpu.trace_start"() <{level = 10 : i32, message = "cqk,cke->cqe"}> : () -> ()
    %cst_27 = arith.constant dense<0.000000e+00> : vector<2x8x8xf32>
    %94 = tpu.matmul %92, %93, %cst_27 {dimension_numbers = #tpu.dot_dimension_numbers<[2], [1], [1], [2], [0, 0, 0, 1, 1, 2], [0], [0]>} : vector<2x8x8xbf16>, vector<2x8x8xbf16>, vector<2x8x8xf32> -> vector<2x8x8xf32>
    "tpu.trace_stop"() : () -> ()
    %95 = tpu.concatenate %43, %60, %77, %94 in 2 : vector<2x8x8xf32>, vector<2x8x8xf32>, vector<2x8x8xf32>, vector<2x8x8xf32> -> vector<2x8x32xf32>
    %96 = vector.shape_cast %95 : vector<2x8x32xf32> to vector<16x32xf32>
    %97 = arith.truncf %96 : vector<16x32xf32> to vector<16x32xbf16>
    %c0_28 = arith.constant 0 : index
    %c0_29 = arith.constant 0 : index
    %c0_30 = arith.constant 0 : index
    %98 = vector.load %arg6[%c0_28, %c0_29, %c0_30] : memref<1x32x32xbf16, #tpu.memory_space<vmem>>, vector<1x32x32xbf16>
    %99 = vector.shape_cast %98 : vector<1x32x32xbf16> to vector<32x32xbf16>
    %cst_31 = arith.constant dense<0.000000e+00> : vector<16x32xf32>
    %100 = tpu.matmul %97, %99, %cst_31 {dimension_numbers = #tpu.dot_dimension_numbers<[1], [0], [0], [1], [0, 0, 1, 1], [], []>} : vector<16x32xbf16>, vector<32x32xbf16>, vector<16x32xf32> -> vector<16x32xf32>
    %c0_32 = arith.constant 0 : index
    %c0_33 = arith.constant 0 : index
    %c0_34 = arith.constant 0 : index
    %101 = vector.load %arg7[%c0_32, %c0_33, %c0_34] : memref<1x1x32xf32, #tpu.memory_space<vmem>>, vector<1x1x32xf32>
    %102 = vector.shape_cast %101 : vector<1x1x32xf32> to vector<1x32xf32>
    %103 = vector.broadcast %102 : vector<1x32xf32> to vector<16x32xf32>
    %104 = arith.addf %100, %103 : vector<16x32xf32>
    %105 = arith.addf %4, %104 : vector<16x32xf32>
    %c0_35 = arith.constant 0 : index
    %c0_36 = arith.constant 0 : index
    %c0_37 = arith.constant 0 : index
    %106 = vector.load %arg8[%c0_35, %c0_36, %c0_37] : memref<1x1x32xf32, #tpu.memory_space<vmem>>, vector<1x1x32xf32>
    %107 = vector.shape_cast %106 : vector<1x1x32xf32> to vector<1x32xf32>
    %c0_38 = arith.constant 0 : index
    %c0_39 = arith.constant 0 : index
    %c0_40 = arith.constant 0 : index
    %108 = vector.load %arg9[%c0_38, %c0_39, %c0_40] : memref<1x1x32xf32, #tpu.memory_space<vmem>>, vector<1x1x32xf32>
    %109 = vector.shape_cast %108 : vector<1x1x32xf32> to vector<1x32xf32>
    %cst_41 = arith.constant dense<0.000000e+00> : vector<16xf32>
    %110 = vector.multi_reduction <add>, %105, %cst_41 [1] : vector<16x32xf32> to vector<16xf32>
    %111 = vector.shape_cast %110 : vector<16xf32> to vector<16x1xf32>
    %cst_42 = arith.constant 3.200000e+01 : f32
    %112 = vector.broadcast %cst_42 : f32 to vector<16x1xf32>
    %113 = arith.divf %111, %112 : vector<16x1xf32>
    %114 = vector.broadcast %113 : vector<16x1xf32> to vector<16x32xf32>
    %115 = arith.subf %105, %114 : vector<16x32xf32>
    %116 = arith.mulf %115, %115 : vector<16x32xf32>
    %cst_43 = arith.constant dense<0.000000e+00> : vector<16xf32>
    %117 = vector.multi_reduction <add>, %116, %cst_43 [1] : vector<16x32xf32> to vector<16xf32>
    %118 = vector.shape_cast %117 : vector<16xf32> to vector<16x1xf32>
    %cst_44 = arith.constant 3.200000e+01 : f32
    %119 = vector.broadcast %cst_44 : f32 to vector<16x1xf32>
    %120 = arith.divf %118, %119 : vector<16x1xf32>
    %cst_45 = arith.constant 9.99999974E-6 : f32
    %121 = vector.broadcast %cst_45 : f32 to vector<16x1xf32>
    %122 = arith.addf %120, %121 : vector<16x1xf32>
    %123 = math.rsqrt %122 : vector<16x1xf32>
    %124 = vector.broadcast %123 : vector<16x1xf32> to vector<16x32xf32>
    %125 = arith.mulf %115, %124 : vector<16x32xf32>
    %126 = vector.broadcast %107 : vector<1x32xf32> to vector<16x32xf32>
    %127 = arith.mulf %125, %126 : vector<16x32xf32>
    %128 = vector.broadcast %109 : vector<1x32xf32> to vector<16x32xf32>
    %129 = arith.addf %127, %128 : vector<16x32xf32>
    %130 = arith.truncf %129 : vector<16x32xf32> to vector<16x32xbf16>
    %c0_46 = arith.constant 0 : index
    %c0_47 = arith.constant 0 : index
    %c0_48 = arith.constant 0 : index
    %131 = vector.load %arg10[%c0_46, %c0_47, %c0_48] : memref<1x32x64xbf16, #tpu.memory_space<vmem>>, vector<1x32x64xbf16>
    %132 = vector.shape_cast %131 : vector<1x32x64xbf16> to vector<32x64xbf16>
    %cst_49 = arith.constant dense<0.000000e+00> : vector<16x64xf32>
    %133 = tpu.matmul %130, %132, %cst_49 {dimension_numbers = #tpu.dot_dimension_numbers<[1], [0], [0], [1], [0, 0, 1, 1], [], []>} : vector<16x32xbf16>, vector<32x64xbf16>, vector<16x64xf32> -> vector<16x64xf32>
    %c0_50 = arith.constant 0 : index
    %c0_51 = arith.constant 0 : index
    %c0_52 = arith.constant 0 : index
    %134 = vector.load %arg11[%c0_50, %c0_51, %c0_52] : memref<1x1x64xf32, #tpu.memory_space<vmem>>, vector<1x1x64xf32>
    %135 = vector.shape_cast %134 : vector<1x1x64xf32> to vector<1x64xf32>
    %136 = vector.broadcast %135 : vector<1x64xf32> to vector<16x64xf32>
    %137 = arith.addf %133, %136 : vector<16x64xf32>
    %cst_53 = arith.constant 0.000000e+00 : f32
    %138 = vector.broadcast %cst_53 : f32 to vector<16x64xf32>
    %139 = arith.maximumf %137, %138 : vector<16x64xf32>
    %140 = arith.truncf %139 : vector<16x64xf32> to vector<16x64xbf16>
    %c0_54 = arith.constant 0 : index
    %c0_55 = arith.constant 0 : index
    %c0_56 = arith.constant 0 : index
    %141 = vector.load %arg12[%c0_54, %c0_55, %c0_56] : memref<1x64x32xbf16, #tpu.memory_space<vmem>>, vector<1x64x32xbf16>
    %142 = vector.shape_cast %141 : vector<1x64x32xbf16> to vector<64x32xbf16>
    %cst_57 = arith.constant dense<0.000000e+00> : vector<16x32xf32>
    %143 = tpu.matmul %140, %142, %cst_57 {dimension_numbers = #tpu.dot_dimension_numbers<[1], [0], [0], [1], [0, 0, 1, 1], [], []>} : vector<16x64xbf16>, vector<64x32xbf16>, vector<16x32xf32> -> vector<16x32xf32>
    %c0_58 = arith.constant 0 : index
    %c0_59 = arith.constant 0 : index
    %c0_60 = arith.constant 0 : index
    %144 = vector.load %arg13[%c0_58, %c0_59, %c0_60] : memref<1x1x32xf32, #tpu.memory_space<vmem>>, vector<1x1x32xf32>
    %145 = vector.shape_cast %144 : vector<1x1x32xf32> to vector<1x32xf32>
    %146 = vector.broadcast %145 : vector<1x32xf32> to vector<16x32xf32>
    %147 = arith.addf %143, %146 : vector<16x32xf32>
    %148 = arith.addf %129, %147 : vector<16x32xf32>
    %c0_61 = arith.constant 0 : index
    %c0_62 = arith.constant 0 : index
    %c0_63 = arith.constant 0 : index
    %149 = vector.load %arg14[%c0_61, %c0_62, %c0_63] : memref<1x1x32xf32, #tpu.memory_space<vmem>>, vector<1x1x32xf32>
    %150 = vector.shape_cast %149 : vector<1x1x32xf32> to vector<1x32xf32>
    %c0_64 = arith.constant 0 : index
    %c0_65 = arith.constant 0 : index
    %c0_66 = arith.constant 0 : index
    %151 = vector.load %arg15[%c0_64, %c0_65, %c0_66] : memref<1x1x32xf32, #tpu.memory_space<vmem>>, vector<1x1x32xf32>
    %152 = vector.shape_cast %151 : vector<1x1x32xf32> to vector<1x32xf32>
    %cst_67 = arith.constant dense<0.000000e+00> : vector<16xf32>
    %153 = vector.multi_reduction <add>, %148, %cst_67 [1] : vector<16x32xf32> to vector<16xf32>
    %154 = vector.shape_cast %153 : vector<16xf32> to vector<16x1xf32>
    %cst_68 = arith.constant 3.200000e+01 : f32
    %155 = vector.broadcast %cst_68 : f32 to vector<16x1xf32>
    %156 = arith.divf %154, %155 : vector<16x1xf32>
    %157 = vector.broadcast %156 : vector<16x1xf32> to vector<16x32xf32>
    %158 = arith.subf %148, %157 : vector<16x32xf32>
    %159 = arith.mulf %158, %158 : vector<16x32xf32>
    %cst_69 = arith.constant dense<0.000000e+00> : vector<16xf32>
    %160 = vector.multi_reduction <add>, %159, %cst_69 [1] : vector<16x32xf32> to vector<16xf32>
    %161 = vector.shape_cast %160 : vector<16xf32> to vector<16x1xf32>
    %cst_70 = arith.constant 3.200000e+01 : f32
    %162 = vector.broadcast %cst_70 : f32 to vector<16x1xf32>
    %163 = arith.divf %161, %162 : vector<16x1xf32>
    %cst_71 = arith.constant 9.99999974E-6 : f32
    %164 = vector.broadcast %cst_71 : f32 to vector<16x1xf32>
    %165 = arith.addf %163, %164 : vector<16x1xf32>
    %166 = math.rsqrt %165 : vector<16x1xf32>
    %167 = vector.broadcast %166 : vector<16x1xf32> to vector<16x32xf32>
    %168 = arith.mulf %158, %167 : vector<16x32xf32>
    %169 = vector.broadcast %150 : vector<1x32xf32> to vector<16x32xf32>
    %170 = arith.mulf %168, %169 : vector<16x32xf32>
    %171 = vector.broadcast %152 : vector<1x32xf32> to vector<16x32xf32>
    %172 = arith.addf %170, %171 : vector<16x32xf32>
    %173 = vector.shape_cast %172 : vector<16x32xf32> to vector<2x8x32xf32>
    %c0_72 = arith.constant 0 : index
    %c0_73 = arith.constant 0 : index
    %c0_74 = arith.constant 0 : index
    %174 = vector.load %arg17[%c0_72, %c0_73, %c0_74] : memref<2x8x32xf32, #tpu.memory_space<vmem>>, vector<2x8x32xf32>
    tpu.vector_store %arg17[%c0_72, %c0_73, %c0_74], %173 {strides = array<i32>} : memref<2x8x32xf32, #tpu.memory_space<vmem>>, vector<2x8x32xf32>,
    %c1_i32 = arith.constant 1 : i32
    %175 = arith.cmpi eq, %arg1, %c1_i32 : i32
    %176 = arith.extui %175 : i1 to i32
    %c0_i32_75 = arith.constant 0 : i32
    %177 = arith.cmpi ne, %176, %c0_i32_75 : i32
    scf.if %177 {
      %178 = vector.shape_cast %172 : vector<16x32xf32> to vector<2x8x32xf32>
      %cst_76 = arith.constant dense<0.000000e+00> : vector<8x32xf32>
      %179 = vector.multi_reduction <add>, %178, %cst_76 [0] : vector<2x8x32xf32> to vector<8x32xf32>
      %180 = vector.shape_cast %179 : vector<8x32xf32> to vector<1x8x32xf32>
      %c0_77 = arith.constant 0 : index
      %c0_78 = arith.constant 0 : index
      %c0_79 = arith.constant 0 : index
      %181 = vector.load %arg16[%c0_77, %c0_78, %c0_79] : memref<1x8x32xf32, #tpu.memory_space<vmem>>, vector<1x8x32xf32>
      tpu.vector_store %arg16[%c0_77, %c0_78, %c0_79], %180 {strides = array<i32>} : memref<1x8x32xf32, #tpu.memory_space<vmem>>, vector<1x8x32xf32>,
    } else {
    }
    return
  }
  func.func @transform_0(%arg0: i32, %arg1: i32) -> (i32, i32, i32) {
    %c0_i32 = arith.constant 0 : i32
    %c0_i32_0 = arith.constant 0 : i32
    %c0_i32_1 = arith.constant 0 : i32
    return %arg0, %c0_i32, %c0_i32_0 : i32, i32, i32
  }
  func.func @transform_1(%arg0: i32, %arg1: i32) -> (i32, i32) {
    %c0_i32 = arith.constant 0 : i32
    %c0_i32_0 = arith.constant 0 : i32
    %c0_i32_1 = arith.constant 0 : i32
    return %c0_i32, %c0_i32_0 : i32, i32
  }
  func.func @transform_2(%arg0: i32, %arg1: i32) -> (i32, i32, i32) {
    %c0_i32 = arith.constant 0 : i32
    %c0_i32_0 = arith.constant 0 : i32
    %c0_i32_1 = arith.constant 0 : i32
    return %arg1, %c0_i32, %c0_i32_0 : i32, i32, i32
  }
  func.func @transform_3(%arg0: i32, %arg1: i32) -> (i32, i32, i32) {
    %c0_i32 = arith.constant 0 : i32
    %c0_i32_0 = arith.constant 0 : i32
    %c0_i32_1 = arith.constant 0 : i32
    return %arg1, %c0_i32, %c0_i32_0 : i32, i32, i32
  }
  func.func @transform_4(%arg0: i32, %arg1: i32) -> (i32, i32, i32) {
    %c0_i32 = arith.constant 0 : i32
    %c0_i32_0 = arith.constant 0 : i32
    %c0_i32_1 = arith.constant 0 : i32
    return %arg1, %c0_i32, %c0_i32_0 : i32, i32, i32
  }
  func.func @transform_5(%arg0: i32, %arg1: i32) -> (i32, i32, i32) {
    %c0_i32 = arith.constant 0 : i32
    %c0_i32_0 = arith.constant 0 : i32
    %c0_i32_1 = arith.constant 0 : i32
    return %arg1, %c0_i32, %c0_i32_0 : i32, i32, i32
  }
  func.func @transform_6(%arg0: i32, %arg1: i32) -> (i32, i32, i32) {
    %c0_i32 = arith.constant 0 : i32
    %c0_i32_0 = arith.constant 0 : i32
    %c0_i32_1 = arith.constant 0 : i32
    return %arg1, %c0_i32, %c0_i32_0 : i32, i32, i32
  }
  func.func @transform_7(%arg0: i32, %arg1: i32) -> (i32, i32, i32) {
    %c0_i32 = arith.constant 0 : i32
    %c0_i32_0 = arith.constant 0 : i32
    %c0_i32_1 = arith.constant 0 : i32
    return %arg1, %c0_i32, %c0_i32_0 : i32, i32, i32
  }
  func.func @transform_8(%arg0: i32, %arg1: i32) -> (i32, i32, i32) {
    %c0_i32 = arith.constant 0 : i32
    %c0_i32_0 = arith.constant 0 : i32
    %c0_i32_1 = arith.constant 0 : i32
    return %arg1, %c0_i32, %c0_i32_0 : i32, i32, i32
  }
  func.func @transform_9(%arg0: i32, %arg1: i32) -> (i32, i32, i32) {
    %c0_i32 = arith.constant 0 : i32
    %c0_i32_0 = arith.constant 0 : i32
    %c0_i32_1 = arith.constant 0 : i32
    return %arg1, %c0_i32, %c0_i32_0 : i32, i32, i32
  }
  func.func @transform_10(%arg0: i32, %arg1: i32) -> (i32, i32, i32) {
    %c0_i32 = arith.constant 0 : i32
    %c0_i32_0 = arith.constant 0 : i32
    %c0_i32_1 = arith.constant 0 : i32
    return %arg1, %c0_i32, %c0_i32_0 : i32, i32, i32
  }
  func.func @transform_11(%arg0: i32, %arg1: i32) -> (i32, i32, i32) {
    %c0_i32 = arith.constant 0 : i32
    %c0_i32_0 = arith.constant 0 : i32
    %c0_i32_1 = arith.constant 0 : i32
    return %arg1, %c0_i32, %c0_i32_0 : i32, i32, i32
  }
  func.func @transform_12(%arg0: i32, %arg1: i32) -> (i32, i32, i32) {
    %c0_i32 = arith.constant 0 : i32
    %c0_i32_0 = arith.constant 0 : i32
    %c0_i32_1 = arith.constant 0 : i32
    return %arg1, %c0_i32, %c0_i32_0 : i32, i32, i32
  }
  func.func @transform_13(%arg0: i32, %arg1: i32) -> (i32, i32, i32) {
    %c0_i32 = arith.constant 0 : i32
    %c0_i32_0 = arith.constant 0 : i32
    %c0_i32_1 = arith.constant 0 : i32
    return %arg1, %c0_i32, %c0_i32_0 : i32, i32, i32
  }
  func.func @transform_14(%arg0: i32, %arg1: i32) -> (i32, i32, i32) {
    %c0_i32 = arith.constant 0 : i32
    %c0_i32_0 = arith.constant 0 : i32
    %c0_i32_1 = arith.constant 0 : i32
    return %arg0, %c0_i32, %c0_i32_0 : i32, i32, i32
  }
}

</mosaic_0001>

<llo_original>
// kernel: transformer_forward.3
$region0: #{transformer_forward.3}
  #allocation0 [shape = 'u32[]', space=smem, size = 0x4, offset = 0x4, fixed_abs, tag = 'smem constant byte address 0x4 - core index']
  #allocation1 [shape = 'u32[72,128]{1,0:T(1,128)}', space=vmem, size = 0x9000, scoped, tag = 'internal scratch']
  %s0 = inlined_call_operand.vmem [shape: f32[2,8,32], index: 0, kind: input, shape index: {}]
  %s1 = inlined_call_operand.vmem [shape: f32[8,8], index: 1, kind: input, shape index: {}]
  %s2 = inlined_call_operand.vmem [shape: f32[8,16], index: 2, kind: input, shape index: {}]
  %s3 = inlined_call_operand.vmem [shape: f32[1,16], index: 3, kind: input, shape index: {}]
  %s4 = inlined_call_operand.vmem [shape: f32[16,32], index: 4, kind: input, shape index: {}]
  %s5 = inlined_call_operand.vmem [shape: f32[1,32], index: 5, kind: input, shape index: {}]
  %s6 = inlined_call_operand.vmem [shape: f32[32,8], index: 6, kind: input, shape index: {}]
  %s7 = inlined_call_operand.vmem [shape: f32[1,8], index: 7, kind: input, shape index: {}]
  %s8 = inlined_call_operand.hbm [shape: f32[8,8], index: 8, kind: output, shape index: {}]
  %s9 = sld [smem:[#allocation0]]
  $region42: #{transformer_forward.3} parent=0
    _
  %s11 = ssub.s32 1, %s9
  %s12 = scalar_select 0, %s11, %s9
  $region1: #{transformer_forward.3} parent=0
    #allocation2 [shape = 'u8[4096]{0}', space=vmem, size = 0x1000, scoped, tag = 'output window, operand 0, single buffered']
    #allocation3 [shape = 's32[1]{0}', space=sflag, size = 0x4, scoped, tag = 'scoped memory for transformer_forward.3']
    %13 = vsyncpa [#allocation3], 0
    // Predicated region
    $region2: #{transformer_forward.3} parent=1 // pred_check
      _
    $region3: #{transformer_forward.3} parent=1 // pred_check_branch
      %15 = sbr.rel (0) target = $region5
    $region4: #{transformer_forward.3} parent=1 // pred_region
      _
    $region5: #{transformer_forward.3} parent=1 // pred_fallthru
      _
    // Predicated region
    $region6: #{transformer_forward.3} parent=1 // pred_check
      _
    $region7: #{transformer_forward.3} parent=1 // pred_check_branch
      %17 = sbr.rel (0) target = $region9
    $region8: #{transformer_forward.3} parent=1 // pred_region
      _
    $region9: #{transformer_forward.3} parent=1 // pred_fallthru
      _
    // Predicated region
    $region10: #{transformer_forward.3} parent=1 // pred_check
      _
    $region11: #{transformer_forward.3} parent=1 // pred_check_branch
      %19 = sbr.rel (0) target = $region13
    $region12: #{transformer_forward.3} parent=1 // pred_region
      _
    $region13: #{transformer_forward.3} parent=1 // pred_fallthru
      _
    // Predicated region
    $region14: #{transformer_forward.3} parent=1 // pred_check
      _
    $region15: #{transformer_forward.3} parent=1 // pred_check_branch
      %21 = sbr.rel (0) target = $region17
    $region16: #{transformer_forward.3} parent=1 // pred_region
      _
    $region17: #{transformer_forward.3} parent=1 // pred_fallthru
      _
    // Predicated region
    $region18: #{transformer_forward.3} parent=1 // pred_check
      _
    $region19: #{transformer_forward.3} parent=1 // pred_check_branch
      %23 = sbr.rel (0) target = $region21
    $region20: #{transformer_forward.3} parent=1 // pred_region
      _
    $region21: #{transformer_forward.3} parent=1 // pred_fallthru
      _
    // Predicated region
    $region22: #{transformer_forward.3} parent=1 // pred_check
      _
    $region23: #{transformer_forward.3} parent=1 // pred_check_branch
      %25 = sbr.rel (0) target = $region25
    $region24: #{transformer_forward.3} parent=1 // pred_region
      _
    $region25: #{transformer_forward.3} parent=1 // pred_fallthru
      _
    // Predicated region
    $region26: #{transformer_forward.3} parent=1 // pred_check
      _
    $region27: #{transformer_forward.3} parent=1 // pred_check_branch
      %27 = sbr.rel (0) target = $region29
    $region28: #{transformer_forward.3} parent=1 // pred_region
      _
    $region29: #{transformer_forward.3} parent=1 // pred_fallthru
      _
    // Predicated region
    $region30: #{transformer_forward.3} parent=1 // pred_check
      _
    $region31: #{transformer_forward.3} parent=1 // pred_check_branch
      %29 = sbr.rel (0) target = $region33
    $region32: #{transformer_forward.3} parent=1 // pred_region
      _
    $region33: #{transformer_forward.3} parent=1 // pred_fallthru
      _
    %v30 = vld [vmem:[%s0] sm:$0xff]
    %v31 = vld [vmem:[%s0 + $0x8] sm:$0xff]
    %vm32 = vcmask 261120
    %v33 = vsel %vm32, %v30, 0.0
    %v34 = vsel %vm32, %v31, 0.0
    %v35 = vadd.f32 %v33, %v34
    %v36 = vld [vmem:[%s1] sm:$0xff]
    %v37 = vld [vmem:[%s2] sm:$0xff]
    %v38 = vld [vmem:[%s3] sm:$0x1]
    %v40 = vperm.slane %v38, 0
    %vm42 = vcmask 64512
    %v44 = vsel %vm42, %v36, 0
    %46 = vmatpush.msra.mxu0 0.0
    %47 = vmatpush.msra.mxu0 0.0
    %48 = vmatpush.msra.mxu0 0.0
    %49 = vmatpush.msra.mxu0 0.0
    %50 = vmatpush.msra.mxu0 0.0
    %51 = vmatpush.msra.mxu0 0.0
    %52 = vmatpush.msra.mxu0 0.0
    %53 = vmatpush.msra.mxu0 0.0
    %54 = vmatpush.msra.mxu0 0.0
    %55 = vmatpush.msra.mxu0 0.0
    %56 = vmatpush.msra.mxu0 0.0
    %57 = vmatpush.msra.mxu0 0.0
    %58 = vmatpush.msra.mxu0 0.0
    %59 = vmatpush.msra.mxu0 0.0
    %60 = vmatpush.msra.mxu0 0.0
    %61 = vmatpush.msra.mxu0 %v37
    %62 = vmatmul.f32.gmra.mxu0 %v44
    %v63 = vpop.f32.mrf.mxu0
    %v64 = vadd.f32 %v40, %v63
    %65 = vdwg.mxu0
    %v66 = vmax.f32 %v64, 0.0
    %v67 = vld [vmem:[%s4] sm:$0xff]
    %v68 = vld [vmem:[%s4 + $0x8] sm:$0xff]
    %v69 = vld [vmem:[%s5] sm:$0x1]
    %v71 = vperm.slane %v69, 0
    %vm73 = vcmask 130048
    %v75 = vsel %vm73, %v66, 0
    %77 = vmatpush.msra.mxu0 0.0
    %78 = vmatpush.msra.mxu0 0.0
    %79 = vmatpush.msra.mxu0 0.0
    %80 = vmatpush.msra.mxu0 0.0
    %81 = vmatpush.msra.mxu0 0.0
    %82 = vmatpush.msra.mxu0 0.0
    %83 = vmatpush.msra.mxu0 0.0
    %84 = vmatpush.msra.mxu0 0.0
    %85 = vmatpush.msra.mxu0 0.0
    %86 = vmatpush.msra.mxu0 0.0
    %87 = vmatpush.msra.mxu0 0.0
    %88 = vmatpush.msra.mxu0 0.0
    %89 = vmatpush.msra.mxu0 0.0
    %90 = vmatpush.msra.mxu0 0.0
    %91 = vmatpush.msra.mxu0 %v68
    %92 = vmatpush.msra.mxu0 %v67
    %93 = vmatmul.f32.gmra.mxu0 %v75
    %v94 = vpop.f32.mrf.mxu0
    %v95 = vadd.f32 %v71, %v94
    %96 = vdwg.mxu0
    %v97 = vmax.f32 %v95, 0.0
    %v98 = vadd.f32 %v35, %v97
    %v99 = vmul.f32 %v98, 0.2
    %v100 = vld [vmem:[%s6] sm:$0xff]
    %v101 = vld [vmem:[%s6 + $0x8] sm:$0xff]
    %v102 = vld [vmem:[%s6 + $0x10] sm:$0xff]
    %v103 = vld [vmem:[%s6 + $0x18] sm:$0xff]
    %v104 = vld [vmem:[%s7] sm:$0x1]
    %v106 = vperm.slane %v104, 0
    %v109 = vsel %vm32, %v99, 0
    %111 = vmatpush.msra.mxu0 0.0
    %112 = vmatpush.msra.mxu0 0.0
    %113 = vmatpush.msra.mxu0 0.0
    %114 = vmatpush.msra.mxu0 0.0
    %115 = vmatpush.msra.mxu0 0.0
    %116 = vmatpush.msra.mxu0 0.0
    %117 = vmatpush.msra.mxu0 0.0
    %118 = vmatpush.msra.mxu0 0.0
    %119 = vmatpush.msra.mxu0 0.0
    %120 = vmatpush.msra.mxu0 0.0
    %121 = vmatpush.msra.mxu0 0.0
    %122 = vmatpush.msra.mxu0 0.0
    %123 = vmatpush.msra.mxu0 %v103
    %124 = vmatpush.msra.mxu0 %v102
    %125 = vmatpush.msra.mxu0 %v101
    %126 = vmatpush.msra.mxu0 %v100
    %127 = vmatmul.f32.gmra.mxu0 %v109
    %v128 = vpop.f32.mrf.mxu0
    %v129 = vadd.f32 %v106, %v128
    %130 = vdwg.mxu0
    %131 = vst.msk [vmem:[#allocation2] sm:$0xff] %vm42, %v129
    // Predicated region
    $region34: #{transformer_forward.3} parent=1 // pred_check
      _
    $region35: #{transformer_forward.3} parent=1 // pred_check_branch
      %133 = sbr.rel (0) target = $region37
    $region36: #{transformer_forward.3} parent=1 // pred_region
      %135 = vsyncadd [#allocation3], 0
      %s137 = sshll.u32 [#allocation2], 4
      %s138 = int_to_ptr.vmem [resolvable:$true] %s137
      %s139 = sshll.u32 %s8, 4
      %s140 = int_to_ptr.hbm [resolvable:$true] %s139
      %142 = dma.vmem_to_hbm [thread:$0]  %s138, 128, %s140, [#allocation3]
    $region37: #{transformer_forward.3} parent=1 // pred_fallthru
      _
    // Predicated region
    $region38: #{transformer_forward.3} parent=1 // pred_check
      _
    $region39: #{transformer_forward.3} parent=1 // pred_check_branch
      %144 = sbr.rel (0) target = $region41
    $region40: #{transformer_forward.3} parent=1 // pred_region
      %146 = dma.done [#allocation3], 128
    $region41: #{transformer_forward.3} parent=1 // pred_fallthru
      _
    %147 = vsyncpa [#allocation3], 1

// kernel: transformer_forward.2
$region0: #{transformer_forward.2}
  #allocation0 [shape = 'u32[]', space=smem, size = 0x4, offset = 0x4, fixed_abs, tag = 'smem constant byte address 0x4 - core index']
  #allocation1 [shape = 'u32[72,128]{1,0:T(1,128)}', space=vmem, size = 0x9000, scoped, tag = 'internal scratch']
  #allocation2 [shape = 'f32[2,8,32]{2,1,0:T(8,128)}', space=vmem, size = 0x2000, scoped, tag = 'scratch operand']
  %s0 = inlined_call_operand.vmem [shape: f32[4,8,32], index: 0, kind: input, shape index: {}]
  %s1 = inlined_call_operand.vmem [shape: f32[8,8], index: 1, kind: input, shape index: {}]
  %s2 = inlined_call_operand.vmem [shape: bf16[2,32,96], index: 2, kind: input, shape index: {}]
  %s3 = inlined_call_operand.vmem [shape: f32[2,1,96], index: 3, kind: input, shape index: {}]
  %s4 = inlined_call_operand.vmem [shape: bf16[2,32,32], index: 4, kind: input, shape index: {}]
  %s5 = inlined_call_operand.vmem [shape: f32[2,1,32], index: 5, kind: input, shape index: {}]
  %s6 = inlined_call_operand.vmem [shape: f32[2,1,32], index: 6, kind: input, shape index: {}]
  %s7 = inlined_call_operand.vmem [shape: f32[2,1,32], index: 7, kind: input, shape index: {}]
  %s8 = inlined_call_operand.vmem [shape: bf16[2,32,64], index: 8, kind: input, shape index: {}]
  %s9 = inlined_call_operand.vmem [shape: f32[2,1,64], index: 9, kind: input, shape index: {}]
  %s10 = inlined_call_operand.vmem [shape: bf16[2,64,32], index: 10, kind: input, shape index: {}]
  %s11 = inlined_call_operand.vmem [shape: f32[2,1,32], index: 11, kind: input, shape index: {}]
  %s12 = inlined_call_operand.vmem [shape: f32[2,1,32], index: 12, kind: input, shape index: {}]
  %s13 = inlined_call_operand.vmem [shape: f32[2,1,32], index: 13, kind: input, shape index: {}]
  %s14 = inlined_call_operand.vmem [shape: f32[2,8,32], index: 14, kind: output, shape index: {}]
  %s15 = sld [smem:[#allocation0]]
  $region97: #{transformer_forward.2} parent=0
    _
  %s17 = ssub.s32 1, %s15
  %s18 = scalar_select 0, %s17, %s15
  loop: start=0, step=1, limit=6
  $region2: #{transformer_forward.2} parent=0 // loop_pre_header
    _
  $region3: #{transformer_forward.2} parent=0 // loop_header
    %s20 = sphi 0, %s24
    %p21 = scmp.ge.s32.totalorder %s20, 6
    %s27 = sphi 0, %s39
    %s28 = sphi 0, %s35
    %s29 = sphi 0, %s27
    %s30 = sphi 0, %s28
    %s31 = sphi 0, %s29
    %s32 = sphi 0, %s30
    %s42 = sphi 0, %s44
    %s45 = sphi 0, %s42
    %s46 = sphi 0, %s45
    %s62 = sphi 0, %s46
    %s66 = sphi 0, %s66
    %s68 = sphi 0, %s66
    %s69 = sphi 0, %s68
    %s83 = sphi 0, %s69
    %s89 = sphi 0, %s91
    %s92 = sphi 0, %s89
    %s93 = sphi 0, %s92
    %s109 = sphi 0, %s93
    %s115 = sphi 0, %s117
    %s118 = sphi 0, %s115
    %s119 = sphi 0, %s118
    %s135 = sphi 0, %s119
    %s141 = sphi 0, %s143
    %s144 = sphi 0, %s141
    %s145 = sphi 0, %s144
    %s161 = sphi 0, %s145
    %s167 = sphi 0, %s169
    %s170 = sphi 0, %s167
    %s171 = sphi 0, %s170
    %s187 = sphi 0, %s171
    %s193 = sphi 0, %s195
    %s196 = sphi 0, %s193
    %s197 = sphi 0, %s196
    %s213 = sphi 0, %s197
    %s219 = sphi 0, %s221
    %s222 = sphi 0, %s219
    %s223 = sphi 0, %s222
    %s239 = sphi 0, %s223
    %s245 = sphi 0, %s247
    %s248 = sphi 0, %s245
    %s249 = sphi 0, %s248
    %s265 = sphi 0, %s249
    %s271 = sphi 0, %s273
    %s274 = sphi 0, %s271
    %s275 = sphi 0, %s274
    %s291 = sphi 0, %s275
    %s297 = sphi 0, %s299
    %s300 = sphi 0, %s297
    %s301 = sphi 0, %s300
    %s317 = sphi 0, %s301
    %s323 = sphi 0, %s325
    %s326 = sphi 0, %s323
    %s327 = sphi 0, %s326
    %s343 = sphi 0, %s327
    %s349 = sphi 0, %s351
    %s352 = sphi 0, %s349
    %s353 = sphi 0, %s352
    %s369 = sphi 0, %s353
    %s375 = sphi 0, %s377
    %s378 = sphi 0, %s375
    %s379 = sphi 0, %s378
    %s395 = sphi 0, %s379
    %s401 = sphi 0, %s403
    %s404 = sphi 0, %s401
    %s405 = sphi 0, %s404
    %s421 = sphi 0, %s405
  $region4: #{transformer_forward.2} parent=0 // loop_header_branch
    %23 = sbr.rel (%p21) target = $region8
  $region5: #{transformer_forward.2} parent=0 // loop_body
    %s25 = ssub.s32 %s20, 1
    %s26 = ssub.s32 %s20, 2
    %s33 = sadd.s32 1, %s28
    %p34 = scmp.ge.s32.totalorder %s33, 2
    %s35 = scalar_select %p34, 0, %s33
    %s36 = sadd.s32 1, %s27
    %s37 = scalar_select %p34, %s36, %s27
    %p38 = scmp.ge.s32.totalorder %s37, 2
    %s39 = scalar_select %p38, 0, %s37
    %s40 = ssub.s32 %s27, %s39
    %p41 = scmp.eq.s32.totalorder %s40, 0
    %s43 = sadd.s32 %s42, 1
    %s44 = scalar_select %p41, %s42, %s43
    %p47 = pneg %p41
    %p48 = scmp.eq.s32.totalorder %s20, 3
    %p49 = por %p47, %p48
    %p50 = scmp.ne.s32.totalorder %s42, %s45
    %p51 = scmp.eq.s32.totalorder %s20, 0
    %p52 = por %p50, %p51
    %p53 = scmp.ne.s32.totalorder %s42, %s45
    %p54 = scmp.eq.s32.totalorder %s25, 3
    %p55 = por %p53, %p54
    %p56 = scmp.ne.s32.totalorder %s45, %s46
    %p57 = scmp.eq.s32.totalorder %s25, 0
    %p58 = por %p56, %p57
    %p59 = scmp.ne.s32.totalorder %s45, %s46
    %p60 = scmp.eq.s32.totalorder %s26, 3
    %p61 = por %p59, %p60
    %p63 = scmp.ne.s32.totalorder %s46, %s62
    %p64 = scmp.eq.s32.totalorder %s26, 0
    %p65 = por %p63, %p64
    %s67 = sadd.s32 %s66, 1
    %p70 = scmp.eq.s32.totalorder %s20, 3
    %p71 = scmp.ne.s32.totalorder %s66, %s68
    %p72 = scmp.eq.s32.totalorder %s20, 0
    %p73 = por %p71, %p72
    %p74 = scmp.ne.s32.totalorder %s66, %s68
    %p75 = scmp.eq.s32.totalorder %s25, 3
    %p76 = por %p74, %p75
    %p77 = scmp.ne.s32.totalorder %s68, %s69
    %p78 = scmp.eq.s32.totalorder %s25, 0
    %p79 = por %p77, %p78
    %p80 = scmp.ne.s32.totalorder %s68, %s69
    %p81 = scmp.eq.s32.totalorder %s26, 3
    %p82 = por %p80, %p81
    %p84 = scmp.ne.s32.totalorder %s69, %s83
    %p85 = scmp.eq.s32.totalorder %s26, 0
    %p86 = por %p84, %p85
    %s87 = ssub.s32 %s28, %s35
    %p88 = scmp.eq.s32.totalorder %s87, 0
    %s90 = sadd.s32 %s89, 1
    %s91 = scalar_select %p88, %s89, %s90
    %p94 = pneg %p88
    %p95 = scmp.eq.s32.totalorder %s20, 3
    %p96 = por %p94, %p95
    %p97 = scmp.ne.s32.totalorder %s89, %s92
    %p98 = scmp.eq.s32.totalorder %s20, 0
    %p99 = por %p97, %p98
    %p100 = scmp.ne.s32.totalorder %s89, %s92
    %p101 = scmp.eq.s32.totalorder %s25, 3
    %p102 = por %p100, %p101
    %p103 = scmp.ne.s32.totalorder %s92, %s93
    %p104 = scmp.eq.s32.totalorder %s25, 0
    %p105 = por %p103, %p104
    %p106 = scmp.ne.s32.totalorder %s92, %s93
    %p107 = scmp.eq.s32.totalorder %s26, 3
    %p108 = por %p106, %p107
    %p110 = scmp.ne.s32.totalorder %s93, %s109
    %p111 = scmp.eq.s32.totalorder %s26, 0
    %p112 = por %p110, %p111
    %s113 = ssub.s32 %s28, %s35
    %p114 = scmp.eq.s32.totalorder %s113, 0
    %s116 = sadd.s32 %s115, 1
    %s117 = scalar_select %p114, %s115, %s116
    %p120 = pneg %p114
    %p121 = scmp.eq.s32.totalorder %s20, 3
    %p122 = por %p120, %p121
    %p123 = scmp.ne.s32.totalorder %s115, %s118
    %p124 = scmp.eq.s32.totalorder %s20, 0
    %p125 = por %p123, %p124
    %p126 = scmp.ne.s32.totalorder %s115, %s118
    %p127 = scmp.eq.s32.totalorder %s25, 3
    %p128 = por %p126, %p127
    %p129 = scmp.ne.s32.totalorder %s118, %s119
    %p130 = scmp.eq.s32.totalorder %s25, 0
    %p131 = por %p129, %p130
    %p132 = scmp.ne.s32.totalorder %s118, %s119
    %p133 = scmp.eq.s32.totalorder %s26, 3
    %p134 = por %p132, %p133
    %p136 = scmp.ne.s32.totalorder %s119, %s135
    %p137 = scmp.eq.s32.totalorder %s26, 0
    %p138 = por %p136, %p137
    %s139 = ssub.s32 %s28, %s35
    %p140 = scmp.eq.s32.totalorder %s139, 0
    %s142 = sadd.s32 %s141, 1
    %s143 = scalar_select %p140, %s141, %s142
    %p146 = pneg %p140
    %p147 = scmp.eq.s32.totalorder %s20, 3
    %p148 = por %p146, %p147
    %p149 = scmp.ne.s32.totalorder %s141, %s144
    %p150 = scmp.eq.s32.totalorder %s20, 0
    %p151 = por %p149, %p150
    %p152 = scmp.ne.s32.totalorder %s141, %s144
    %p153 = scmp.eq.s32.totalorder %s25, 3
    %p154 = por %p152, %p153
    %p155 = scmp.ne.s32.totalorder %s144, %s145
    %p156 = scmp.eq.s32.totalorder %s25, 0
    %p157 = por %p155, %p156
    %p158 = scmp.ne.s32.totalorder %s144, %s145
    %p159 = scmp.eq.s32.totalorder %s26, 3
    %p160 = por %p158, %p159
    %p162 = scmp.ne.s32.totalorder %s145, %s161
    %p163 = scmp.eq.s32.totalorder %s26, 0
    %p164 = por %p162, %p163
    %s165 = ssub.s32 %s28, %s35
    %p166 = scmp.eq.s32.totalorder %s165, 0
    %s168 = sadd.s32 %s167, 1
    %s169 = scalar_select %p166, %s167, %s168
    %p172 = pneg %p166
    %p173 = scmp.eq.s32.totalorder %s20, 3
    %p174 = por %p172, %p173
    %p175 = scmp.ne.s32.totalorder %s167, %s170
    %p176 = scmp.eq.s32.totalorder %s20, 0
    %p177 = por %p175, %p176
    %p178 = scmp.ne.s32.totalorder %s167, %s170
    %p179 = scmp.eq.s32.totalorder %s25, 3
    %p180 = por %p178, %p179
    %p181 = scmp.ne.s32.totalorder %s170, %s171
    %p182 = scmp.eq.s32.totalorder %s25, 0
    %p183 = por %p181, %p182
    %p184 = scmp.ne.s32.totalorder %s170, %s171
    %p185 = scmp.eq.s32.totalorder %s26, 3
    %p186 = por %p184, %p185
    %p188 = scmp.ne.s32.totalorder %s171, %s187
    %p189 = scmp.eq.s32.totalorder %s26, 0
    %p190 = por %p188, %p189
    %s191 = ssub.s32 %s28, %s35
    %p192 = scmp.eq.s32.totalorder %s191, 0
    %s194 = sadd.s32 %s193, 1
    %s195 = scalar_select %p192, %s193, %s194
    %p198 = pneg %p192
    %p199 = scmp.eq.s32.totalorder %s20, 3
    %p200 = por %p198, %p199
    %p201 = scmp.ne.s32.totalorder %s193, %s196
    %p202 = scmp.eq.s32.totalorder %s20, 0
    %p203 = por %p201, %p202
    %p204 = scmp.ne.s32.totalorder %s193, %s196
    %p205 = scmp.eq.s32.totalorder %s25, 3
    %p206 = por %p204, %p205
    %p207 = scmp.ne.s32.totalorder %s196, %s197
    %p208 = scmp.eq.s32.totalorder %s25, 0
    %p209 = por %p207, %p208
    %p210 = scmp.ne.s32.totalorder %s196, %s197
    %p211 = scmp.eq.s32.totalorder %s26, 3
    %p212 = por %p210, %p211
    %p214 = scmp.ne.s32.totalorder %s197, %s213
    %p215 = scmp.eq.s32.totalorder %s26, 0
    %p216 = por %p214, %p215
    %s217 = ssub.s32 %s28, %s35
    %p218 = scmp.eq.s32.totalorder %s217, 0
    %s220 = sadd.s32 %s219, 1
    %s221 = scalar_select %p218, %s219, %s220
    %p224 = pneg %p218
    %p225 = scmp.eq.s32.totalorder %s20, 3
    %p226 = por %p224, %p225
    %p227 = scmp.ne.s32.totalorder %s219, %s222
    %p228 = scmp.eq.s32.totalorder %s20, 0
    %p229 = por %p227, %p228
    %p230 = scmp.ne.s32.totalorder %s219, %s222
    %p231 = scmp.eq.s32.totalorder %s25, 3
    %p232 = por %p230, %p231
    %p233 = scmp.ne.s32.totalorder %s222, %s223
    %p234 = scmp.eq.s32.totalorder %s25, 0
    %p235 = por %p233, %p234
    %p236 = scmp.ne.s32.totalorder %s222, %s223
    %p237 = scmp.eq.s32.totalorder %s26, 3
    %p238 = por %p236, %p237
    %p240 = scmp.ne.s32.totalorder %s223, %s239
    %p241 = scmp.eq.s32.totalorder %s26, 0
    %p242 = por %p240, %p241
    %s243 = ssub.s32 %s28, %s35
    %p244 = scmp.eq.s32.totalorder %s243, 0
    %s246 = sadd.s32 %s245, 1
    %s247 = scalar_select %p244, %s245, %s246
    %p250 = pneg %p244
    %p251 = scmp.eq.s32.totalorder %s20, 3
    %p252 = por %p250, %p251
    %p253 = scmp.ne.s32.totalorder %s245, %s248
    %p254 = scmp.eq.s32.totalorder %s20, 0
    %p255 = por %p253, %p254
    %p256 = scmp.ne.s32.totalorder %s245, %s248
    %p257 = scmp.eq.s32.totalorder %s25, 3
    %p258 = por %p256, %p257
    %p259 = scmp.ne.s32.totalorder %s248, %s249
    %p260 = scmp.eq.s32.totalorder %s25, 0
    %p261 = por %p259, %p260
    %p262 = scmp.ne.s32.totalorder %s248, %s249
    %p263 = scmp.eq.s32.totalorder %s26, 3
    %p264 = por %p262, %p263
    %p266 = scmp.ne.s32.totalorder %s249, %s265
    %p267 = scmp.eq.s32.totalorder %s26, 0
    %p268 = por %p266, %p267
    %s269 = ssub.s32 %s28, %s35
    %p270 = scmp.eq.s32.totalorder %s269, 0
    %s272 = sadd.s32 %s271, 1
    %s273 = scalar_select %p270, %s271, %s272
    %p276 = pneg %p270
    %p277 = scmp.eq.s32.totalorder %s20, 3
    %p278 = por %p276, %p277
    %p279 = scmp.ne.s32.totalorder %s271, %s274
    %p280 = scmp.eq.s32.totalorder %s20, 0
    %p281 = por %p279, %p280
    %p282 = scmp.ne.s32.totalorder %s271, %s274
    %p283 = scmp.eq.s32.totalorder %s25, 3
    %p284 = por %p282, %p283
    %p285 = scmp.ne.s32.totalorder %s274, %s275
    %p286 = scmp.eq.s32.totalorder %s25, 0
    %p287 = por %p285, %p286
    %p288 = scmp.ne.s32.totalorder %s274, %s275
    %p289 = scmp.eq.s32.totalorder %s26, 3
    %p290 = por %p288, %p289
    %p292 = scmp.ne.s32.totalorder %s275, %s291
    %p293 = scmp.eq.s32.totalorder %s26, 0
    %p294 = por %p292, %p293
    %s295 = ssub.s32 %s28, %s35
    %p296 = scmp.eq.s32.totalorder %s295, 0
    %s298 = sadd.s32 %s297, 1
    %s299 = scalar_select %p296, %s297, %s298
    %p302 = pneg %p296
    %p303 = scmp.eq.s32.totalorder %s20, 3
    %p304 = por %p302, %p303
    %p305 = scmp.ne.s32.totalorder %s297, %s300
    %p306 = scmp.eq.s32.totalorder %s20, 0
    %p307 = por %p305, %p306
    %p308 = scmp.ne.s32.totalorder %s297, %s300
    %p309 = scmp.eq.s32.totalorder %s25, 3
    %p310 = por %p308, %p309
    %p311 = scmp.ne.s32.totalorder %s300, %s301
    %p312 = scmp.eq.s32.totalorder %s25, 0
    %p313 = por %p311, %p312
    %p314 = scmp.ne.s32.totalorder %s300, %s301
    %p315 = scmp.eq.s32.totalorder %s26, 3
    %p316 = por %p314, %p315
    %p318 = scmp.ne.s32.totalorder %s301, %s317
    %p319 = scmp.eq.s32.totalorder %s26, 0
    %p320 = por %p318, %p319
    %s321 = ssub.s32 %s28, %s35
    %p322 = scmp.eq.s32.totalorder %s321, 0
    %s324 = sadd.s32 %s323, 1
    %s325 = scalar_select %p322, %s323, %s324
    %p328 = pneg %p322
    %p329 = scmp.eq.s32.totalorder %s20, 3
    %p330 = por %p328, %p329
    %p331 = scmp.ne.s32.totalorder %s323, %s326
    %p332 = scmp.eq.s32.totalorder %s20, 0
    %p333 = por %p331, %p332
    %p334 = scmp.ne.s32.totalorder %s323, %s326
    %p335 = scmp.eq.s32.totalorder %s25, 3
    %p336 = por %p334, %p335
    %p337 = scmp.ne.s32.totalorder %s326, %s327
    %p338 = scmp.eq.s32.totalorder %s25, 0
    %p339 = por %p337, %p338
    %p340 = scmp.ne.s32.totalorder %s326, %s327
    %p341 = scmp.eq.s32.totalorder %s26, 3
    %p342 = por %p340, %p341
    %p344 = scmp.ne.s32.totalorder %s327, %s343
    %p345 = scmp.eq.s32.totalorder %s26, 0
    %p346 = por %p344, %p345
    %s347 = ssub.s32 %s28, %s35
    %p348 = scmp.eq.s32.totalorder %s347, 0
    %s350 = sadd.s32 %s349, 1
    %s351 = scalar_select %p348, %s349, %s350
    %p354 = pneg %p348
    %p355 = scmp.eq.s32.totalorder %s20, 3
    %p356 = por %p354, %p355
    %p357 = scmp.ne.s32.totalorder %s349, %s352
    %p358 = scmp.eq.s32.totalorder %s20, 0
    %p359 = por %p357, %p358
    %p360 = scmp.ne.s32.totalorder %s349, %s352
    %p361 = scmp.eq.s32.totalorder %s25, 3
    %p362 = por %p360, %p361
    %p363 = scmp.ne.s32.totalorder %s352, %s353
    %p364 = scmp.eq.s32.totalorder %s25, 0
    %p365 = por %p363, %p364
    %p366 = scmp.ne.s32.totalorder %s352, %s353
    %p367 = scmp.eq.s32.totalorder %s26, 3
    %p368 = por %p366, %p367
    %p370 = scmp.ne.s32.totalorder %s353, %s369
    %p371 = scmp.eq.s32.totalorder %s26, 0
    %p372 = por %p370, %p371
    %s373 = ssub.s32 %s28, %s35
    %p374 = scmp.eq.s32.totalorder %s373, 0
    %s376 = sadd.s32 %s375, 1
    %s377 = scalar_select %p374, %s375, %s376
    %p380 = pneg %p374
    %p381 = scmp.eq.s32.totalorder %s20, 3
    %p382 = por %p380, %p381
    %p383 = scmp.ne.s32.totalorder %s375, %s378
    %p384 = scmp.eq.s32.totalorder %s20, 0
    %p385 = por %p383, %p384
    %p386 = scmp.ne.s32.totalorder %s375, %s378
    %p387 = scmp.eq.s32.totalorder %s25, 3
    %p388 = por %p386, %p387
    %p389 = scmp.ne.s32.totalorder %s378, %s379
    %p390 = scmp.eq.s32.totalorder %s25, 0
    %p391 = por %p389, %p390
    %p392 = scmp.ne.s32.totalorder %s378, %s379
    %p393 = scmp.eq.s32.totalorder %s26, 3
    %p394 = por %p392, %p393
    %p396 = scmp.ne.s32.totalorder %s379, %s395
    %p397 = scmp.eq.s32.totalorder %s26, 0
    %p398 = por %p396, %p397
    %s399 = ssub.s32 %s27, %s39
    %p400 = scmp.eq.s32.totalorder %s399, 0
    %s402 = sadd.s32 %s401, 1
    %s403 = scalar_select %p400, %s401, %s402
    %p406 = pneg %p400
    %p407 = scmp.eq.s32.totalorder %s20, 3
    %p408 = por %p406, %p407
    %p409 = scmp.ne.s32.totalorder %s401, %s404
    %p410 = scmp.eq.s32.totalorder %s20, 0
    %p411 = por %p409, %p410
    %p412 = scmp.ne.s32.totalorder %s401, %s404
    %p413 = scmp.eq.s32.totalorder %s25, 3
    %p414 = por %p412, %p413
    %p415 = scmp.ne.s32.totalorder %s404, %s405
    %p416 = scmp.eq.s32.totalorder %s25, 0
    %p417 = por %p415, %p416
    %p418 = scmp.ne.s32.totalorder %s404, %s405
    %p419 = scmp.eq.s32.totalorder %s26, 3
    %p420 = por %p418, %p419
    %p422 = scmp.ne.s32.totalorder %s405, %s421
    %p423 = scmp.eq.s32.totalorder %s26, 0
    %p424 = por %p422, %p423
    %p425 = scmp.le.s32.totalorder 1, %s20
    %p426 = scmp.lt.s32.totalorder %s20, 5
    %p427 = pnand %p425, %p426
    %p428 = pneg %p427
    // Predicated region
    $region9: #{transformer_forward.2} parent=5 // pred_check
      _
    $region10: #{transformer_forward.2} parent=5 // pred_check_branch
      %430 = sbr.rel (%p427) target = $region12
    $region11: #{transformer_forward.2} parent=5 // pred_region
      %s431 = ssub.s32 %s20, 1
      // Predicated region
      $region13: #{transformer_forward.2} parent=11 // pred_check
        %p432 = pneg %p79
      $region14: #{transformer_forward.2} parent=11 // pred_check_branch
        %434 = sbr.rel (%p432) target = $region16
      $region15: #{transformer_forward.2} parent=11 // pred_region
        _
      $region16: #{transformer_forward.2} parent=11 // pred_fallthru
        _
    $region12: #{transformer_forward.2} parent=5 // pred_fallthru
      _
    %p435 = scmp.lt.s32.totalorder %s20, 4
    // Predicated region
    $region17: #{transformer_forward.2} parent=5 // pred_check
      %p436 = pneg %p435
    $region18: #{transformer_forward.2} parent=5 // pred_check_branch
      %438 = sbr.rel (%p436) target = $region20
    $region19: #{transformer_forward.2} parent=5 // pred_region
      // Predicated region
      $region21: #{transformer_forward.2} parent=19 // pred_check
        %p439 = pneg %p52
      $region22: #{transformer_forward.2} parent=19 // pred_check_branch
        %441 = sbr.rel (%p439) target = $region24
      $region23: #{transformer_forward.2} parent=19 // pred_region
        %s442 = smul.u32 2, %s27
        %p443 = scmp.lt.s32.totalorder %s442, 3
        %s444 = scalar_select %p443, %s442, 3
        %s445 = smul.addr %s444, 8
        %s446 = scalar_lea.vmem %s0, %s445
        %s447 = smul.u32 2, %s27
      $region24: #{transformer_forward.2} parent=19 // pred_fallthru
        _
      // Predicated region
      $region25: #{transformer_forward.2} parent=19 // pred_check
        %p448 = pneg %p99
      $region26: #{transformer_forward.2} parent=19 // pred_check_branch
        %450 = sbr.rel (%p448) target = $region28
      $region27: #{transformer_forward.2} parent=19 // pred_region
        %p451 = scmp.lt.s32.totalorder %s28, 1
        %s452 = scalar_select %p451, %s28, 1
        %s453 = smul.addr %s452, 4
        %s454 = smul.addr %s453, 4
        %s455 = scalar_lea.vmem %s2, %s454
      $region28: #{transformer_forward.2} parent=19 // pred_fallthru
        _
      // Predicated region
      $region29: #{transformer_forward.2} parent=19 // pred_check
        %p456 = pneg %p125
      $region30: #{transformer_forward.2} parent=19 // pred_check_branch
        %458 = sbr.rel (%p456) target = $region32
      $region31: #{transformer_forward.2} parent=19 // pred_region
        %p459 = scmp.lt.s32.totalorder %s28, 1
        %s460 = scalar_select %p459, %s28, 1
        %s461 = scalar_lea.vmem %s3, %s460
      $region32: #{transformer_forward.2} parent=19 // pred_fallthru
        _
      // Predicated region
      $region33: #{transformer_forward.2} parent=19 // pred_check
        %p462 = pneg %p151
      $region34: #{transformer_forward.2} parent=19 // pred_check_branch
        %464 = sbr.rel (%p462) target = $region36
      $region35: #{transformer_forward.2} parent=19 // pred_region
        %p465 = scmp.lt.s32.totalorder %s28, 1
        %s466 = scalar_select %p465, %s28, 1
        %s467 = smul.addr %s466, 4
        %s468 = smul.addr %s467, 4
        %s469 = scalar_lea.vmem %s4, %s468
      $region36: #{transformer_forward.2} parent=19 // pred_fallthru
        _
      // Predicated region
      $region37: #{transformer_forward.2} parent=19 // pred_check
        %p470 = pneg %p177
      $region38: #{transformer_forward.2} parent=19 // pred_check_branch
        %472 = sbr.rel (%p470) target = $region40
      $region39: #{transformer_forward.2} parent=19 // pred_region
        %p473 = scmp.lt.s32.totalorder %s28, 1
        %s474 = scalar_select %p473, %s28, 1
        %s475 = scalar_lea.vmem %s5, %s474
      $region40: #{transformer_forward.2} parent=19 // pred_fallthru
        _
      // Predicated region
      $region41: #{transformer_forward.2} parent=19 // pred_check
        %p476 = pneg %p203
      $region42: #{transformer_forward.2} parent=19 // pred_check_branch
        %478 = sbr.rel (%p476) target = $region44
      $region43: #{transformer_forward.2} parent=19 // pred_region
        %p479 = scmp.lt.s32.totalorder %s28, 1
        %s480 = scalar_select %p479, %s28, 1
        %s481 = scalar_lea.vmem %s6, %s480
      $region44: #{transformer_forward.2} parent=19 // pred_fallthru
        _
      // Predicated region
      $region45: #{transformer_forward.2} parent=19 // pred_check
        %p482 = pneg %p229
      $region46: #{transformer_forward.2} parent=19 // pred_check_branch
        %484 = sbr.rel (%p482) target = $region48
      $region47: #{transformer_forward.2} parent=19 // pred_region
        %p485 = scmp.lt.s32.totalorder %s28, 1
        %s486 = scalar_select %p485, %s28, 1
        %s487 = scalar_lea.vmem %s7, %s486
      $region48: #{transformer_forward.2} parent=19 // pred_fallthru
        _
      // Predicated region
      $region49: #{transformer_forward.2} parent=19 // pred_check
        %p488 = pneg %p255
      $region50: #{transformer_forward.2} parent=19 // pred_check_branch
        %490 = sbr.rel (%p488) target = $region52
      $region51: #{transformer_forward.2} parent=19 // pred_region
        %p491 = scmp.lt.s32.totalorder %s28, 1
        %s492 = scalar_select %p491, %s28, 1
        %s493 = smul.addr %s492, 4
        %s494 = smul.addr %s493, 4
        %s495 = scalar_lea.vmem %s8, %s494
      $region52: #{transformer_forward.2} parent=19 // pred_fallthru
        _
      // Predicated region
      $region53: #{transformer_forward.2} parent=19 // pred_check
        %p496 = pneg %p281
      $region54: #{transformer_forward.2} parent=19 // pred_check_branch
        %498 = sbr.rel (%p496) target = $region56
      $region55: #{transformer_forward.2} parent=19 // pred_region
        %p499 = scmp.lt.s32.totalorder %s28, 1
        %s500 = scalar_select %p499, %s28, 1
        %s501 = scalar_lea.vmem %s9, %s500
      $region56: #{transformer_forward.2} parent=19 // pred_fallthru
        _
      // Predicated region
      $region57: #{transformer_forward.2} parent=19 // pred_check
        %p502 = pneg %p307
      $region58: #{transformer_forward.2} parent=19 // pred_check_branch
        %504 = sbr.rel (%p502) target = $region60
      $region59: #{transformer_forward.2} parent=19 // pred_region
        %p505 = scmp.lt.s32.totalorder %s28, 1
        %s506 = scalar_select %p505, %s28, 1
        %s507 = smul.addr %s506, 8
        %s508 = smul.addr %s507, 4
        %s509 = scalar_lea.vmem %s10, %s508
      $region60: #{transformer_forward.2} parent=19 // pred_fallthru
        _
      // Predicated region
      $region61: #{transformer_forward.2} parent=19 // pred_check
        %p510 = pneg %p333
      $region62: #{transformer_forward.2} parent=19 // pred_check_branch
        %512 = sbr.rel (%p510) target = $region64
      $region63: #{transformer_forward.2} parent=19 // pred_region
        %p513 = scmp.lt.s32.totalorder %s28, 1
        %s514 = scalar_select %p513, %s28, 1
        %s515 = scalar_lea.vmem %s11, %s514
      $region64: #{transformer_forward.2} parent=19 // pred_fallthru
        _
      // Predicated region
      $region65: #{transformer_forward.2} parent=19 // pred_check
        %p516 = pneg %p359
      $region66: #{transformer_forward.2} parent=19 // pred_check_branch
        %518 = sbr.rel (%p516) target = $region68
      $region67: #{transformer_forward.2} parent=19 // pred_region
        %p519 = scmp.lt.s32.totalorder %s28, 1
        %s520 = scalar_select %p519, %s28, 1
        %s521 = scalar_lea.vmem %s12, %s520
      $region68: #{transformer_forward.2} parent=19 // pred_fallthru
        _
      // Predicated region
      $region69: #{transformer_forward.2} parent=19 // pred_check
        %p522 = pneg %p385
      $region70: #{transformer_forward.2} parent=19 // pred_check_branch
        %524 = sbr.rel (%p522) target = $region72
      $region71: #{transformer_forward.2} parent=19 // pred_region
        %p525 = scmp.lt.s32.totalorder %s28, 1
        %s526 = scalar_select %p525, %s28, 1
        %s527 = scalar_lea.vmem %s13, %s526
      $region72: #{transformer_forward.2} parent=19 // pred_fallthru
        _
    $region20: #{transformer_forward.2} parent=5 // pred_fallthru
      _
    %p528 = scmp.le.s32.totalorder 1, %s20
    %p529 = scmp.lt.s32.totalorder %s20, 5
    %p530 = pnand %p528, %p529
    %p531 = pneg %p530
    // Predicated region
    $region73: #{transformer_forward.2} parent=5 // pred_check
      _
    $region74: #{transformer_forward.2} parent=5 // pred_check_branch
      %533 = sbr.rel (%p530) target = $region76
    $region75: #{transformer_forward.2} parent=5 // pred_region
      %s534 = ssub.s32 %s20, 1
      %s535 = smul.u32 2, %s29
      %p536 = scmp.lt.s32.totalorder %s535, 3
      %s537 = scalar_select %p536, %s535, 3
      %s538 = smul.addr %s537, 8
      %s539 = scalar_lea.vmem %s0, %s538
      %p540 = pneg %p58
      %p541 = pneg %p55
      %p542 = pneg %p79
      %p543 = pneg %p76
      %p544 = scmp.lt.s32.totalorder %s30, 1
      %s545 = scalar_select %p544, %s30, 1
      %s546 = smul.addr %s545, 4
      %s547 = smul.addr %s546, 4
      %s548 = scalar_lea.vmem %s2, %s547
      %p549 = pneg %p105
      %p550 = pneg %p102
      %p551 = scmp.lt.s32.totalorder %s30, 1
      %s552 = scalar_select %p551, %s30, 1
      %s553 = scalar_lea.vmem %s3, %s552
      %p554 = pneg %p131
      %p555 = pneg %p128
      %p556 = scmp.lt.s32.totalorder %s30, 1
      %s557 = scalar_select %p556, %s30, 1
      %s558 = smul.addr %s557, 4
      %s559 = smul.addr %s558, 4
      %s560 = scalar_lea.vmem %s4, %s559
      %p561 = pneg %p157
      %p562 = pneg %p154
      %p563 = scmp.lt.s32.totalorder %s30, 1
      %s564 = scalar_select %p563, %s30, 1
      %s565 = scalar_lea.vmem %s5, %s564
      %p566 = pneg %p183
      %p567 = pneg %p180
      %p568 = scmp.lt.s32.totalorder %s30, 1
      %s569 = scalar_select %p568, %s30, 1
      %s570 = scalar_lea.vmem %s6, %s569
      %p571 = pneg %p209
      %p572 = pneg %p206
      %p573 = scmp.lt.s32.totalorder %s30, 1
      %s574 = scalar_select %p573, %s30, 1
      %s575 = scalar_lea.vmem %s7, %s574
      %p576 = pneg %p235
      %p577 = pneg %p232
      %p578 = scmp.lt.s32.totalorder %s30, 1
      %s579 = scalar_select %p578, %s30, 1
      %s580 = smul.addr %s579, 4
      %s581 = smul.addr %s580, 4
      %s582 = scalar_lea.vmem %s8, %s581
      %p583 = pneg %p261
      %p584 = pneg %p258
      %p585 = scmp.lt.s32.totalorder %s30, 1
      %s586 = scalar_select %p585, %s30, 1
      %s587 = scalar_lea.vmem %s9, %s586
      %p588 = pneg %p287
      %p589 = pneg %p284
      %p590 = scmp.lt.s32.totalorder %s30, 1
      %s591 = scalar_select %p590, %s30, 1
      %s592 = smul.addr %s591, 8
      %s593 = smul.addr %s592, 4
      %s594 = scalar_lea.vmem %s10, %s593
      %p595 = pneg %p313
      %p596 = pneg %p310
      %p597 = scmp.lt.s32.totalorder %s30, 1
      %s598 = scalar_select %p597, %s30, 1
      %s599 = scalar_lea.vmem %s11, %s598
      %p600 = pneg %p339
      %p601 = pneg %p336
      %p602 = scmp.lt.s32.totalorder %s30, 1
      %s603 = scalar_select %p602, %s30, 1
      %s604 = scalar_lea.vmem %s12, %s603
      %p605 = pneg %p365
      %p606 = pneg %p362
      %p607 = scmp.lt.s32.totalorder %s30, 1
      %s608 = scalar_select %p607, %s30, 1
      %s609 = scalar_lea.vmem %s13, %s608
      %p610 = pneg %p391
      %p611 = pneg %p388
      %p612 = pneg %p417
      %p613 = pneg %p414
      %p614 = scmp.lt.s32.totalorder %s29, 1
      %s615 = scalar_select %p614, %s29, 1
      %s616 = smul.addr %s615, 8
      %s617 = scalar_lea.vmem %s14, %s616
      %s618 = smul.u32 2, %s29
      %p619 = scmp.lt.s32.totalorder %s618, 3
      %s620 = scalar_select %p619, %s618, 3
      %s621 = smul.addr %s620, 8
      %s622 = scalar_lea.vmem %s0, %s621
      %s623 = smul.u32 2, %s29
      %p624 = scmp.lt.s32.totalorder %s30, 1
      %s625 = scalar_select %p624, %s30, 1
      %s626 = smul.addr %s625, 4
      %s627 = smul.addr %s626, 4
      %s628 = scalar_lea.vmem %s2, %s627
      %p629 = scmp.lt.s32.totalorder %s30, 1
      %s630 = scalar_select %p629, %s30, 1
      %s631 = scalar_lea.vmem %s3, %s630
      %p632 = scmp.lt.s32.totalorder %s30, 1
      %s633 = scalar_select %p632, %s30, 1
      %s634 = smul.addr %s633, 4
      %s635 = smul.addr %s634, 4
      %s636 = scalar_lea.vmem %s4, %s635
      %p637 = scmp.lt.s32.totalorder %s30, 1
      %s638 = scalar_select %p637, %s30, 1
      %s639 = scalar_lea.vmem %s5, %s638
      %p640 = scmp.lt.s32.totalorder %s30, 1
      %s641 = scalar_select %p640, %s30, 1
      %s642 = scalar_lea.vmem %s6, %s641
      %p643 = scmp.lt.s32.totalorder %s30, 1
      %s644 = scalar_select %p643, %s30, 1
      %s645 = scalar_lea.vmem %s7, %s644
      %p646 = scmp.lt.s32.totalorder %s30, 1
      %s647 = scalar_select %p646, %s30, 1
      %s648 = smul.addr %s647, 4
      %s649 = smul.addr %s648, 4
      %s650 = scalar_lea.vmem %s8, %s649
      %p651 = scmp.lt.s32.totalorder %s30, 1
      %s652 = scalar_select %p651, %s30, 1
      %s653 = scalar_lea.vmem %s9, %s652
      %p654 = scmp.lt.s32.totalorder %s30, 1
      %s655 = scalar_select %p654, %s30, 1
      %s656 = smul.addr %s655, 8
      %s657 = smul.addr %s656, 4
      %s658 = scalar_lea.vmem %s10, %s657
      %p659 = scmp.lt.s32.totalorder %s30, 1
      %s660 = scalar_select %p659, %s30, 1
      %s661 = scalar_lea.vmem %s11, %s660
      %p662 = scmp.lt.s32.totalorder %s30, 1
      %s663 = scalar_select %p662, %s30, 1
      %s664 = scalar_lea.vmem %s12, %s663
      %p665 = scmp.lt.s32.totalorder %s30, 1
      %s666 = scalar_select %p665, %s30, 1
      %s667 = scalar_lea.vmem %s13, %s666
      %p668 = scmp.lt.s32.totalorder %s29, 1
      %s669 = scalar_select %p668, %s29, 1
      %s670 = smul.addr %s669, 8
      %s671 = scalar_lea.vmem %s14, %s670
      %p673 = scmp.eq.s32.totalorder %s30, 0
      // Predicated region
      $region77: #{transformer_forward.2} parent=75 // pred_check
        %p674 = pneg %p673
      $region78: #{transformer_forward.2} parent=75 // pred_check_branch
        %676 = sbr.rel (%p674) target = $region80
      $region79: #{transformer_forward.2} parent=75 // pred_region
        %v677 = vld [vmem:[%s622] sm:$0xff]
        %v678 = vld [vmem:[%s622 + $0x8] sm:$0xff]
        %vm679 = vcmask 261120
        %680 = vst.msk [vmem:[#allocation2] sm:$0xff] %vm679, %v677
        %681 = vst.msk [vmem:[#allocation2 + $0x8] sm:$0xff] %vm679, %v678
      $region80: #{transformer_forward.2} parent=75 // pred_fallthru
        _
      %v682 = vld [vmem:[#allocation2] sm:$0xff]
      %v683 = vld [vmem:[#allocation2 + $0x8] sm:$0xff]
      %v684 = vpack.c.bf16 %v683, %v682
      %v685 = vld [vmem:[%s628] sm:$0xf]
      %v686 = vld [vmem:[%s628 + $0x4] sm:$0xf]
      %v687 = vld [vmem:[%s628 + $0x8] sm:$0xf]
      %v688 = vld [vmem:[%s628 + $0xc] sm:$0xf]
      %v689 = vld [vmem:[%s631] sm:$0x1]
      %v691 = vperm.slane %v689, 0
      %v697 = vunpack.c.l.b16 %v685
      %v698 = vunpack.c.l.b16 %v686
      %v699 = vunpack.c.l.b16 %v687
      %v700 = vunpack.c.l.b16 %v688
      %v701 = vpack.c.b16 %v698, %v697
      %v702 = vpack.c.b16 %v700, %v699
      %vm705 = vcmask 261120
      %v707 = vsel %vm705, %v684, 0
      %709 = vmatpush.bf16.msra.mxu0 0
      %710 = vmatpush.bf16.msra.mxu0 0
      %711 = vmatpush.bf16.msra.mxu0 0
      %712 = vmatpush.bf16.msra.mxu0 0
      %713 = vmatpush.bf16.msra.mxu0 0
      %714 = vmatpush.bf16.msra.mxu0 0
      %715 = vmatpush.bf16.msra.mxu0 %v702
      %716 = vmatpush.bf16.msra.mxu0 %v701
      %717 = vmatmul.bf16.gmra.mxu0 %v707
      %v718 = vpop.f32.mrf.mxu0
      %v719 = vadd.f32 %v691, %v718
      %v720 = vpop.f32.mrf.mxu0
      %v721 = vadd.f32 %v691, %v720
      %722 = vdwg.mxu0
      %v723 = vmul.f32 %v719, 0.35355338
      %v724 = vmul.f32 %v721, 0.35355338
      %v725 = vpack.c.bf16 %v723, %v723
      %v726 = vpack.c.bf16 %v724, %v724
      %v727 = vpack.c.bf16 %v719, %v719
      %v728 = vpack.c.bf16 %v721, %v721
      %v729 = vld [vmem:[%s1] sm:$0xff]
      %v731 = vunpack.c.l.b16 %v727
      %v732 = vpack.c.b16 %v731, %v731
      %733 = vrot.lane.b32.xlu0 %v732, 96
      %v734 = vpop.permute.xlu0 %733
      %vm735 = vcmask 64512
      %v737 = vsel %vm735, %v725, 0
      %v740 = vsel %vm735, %v734, 0
      %742 = vmatpush.bf16.xpose.msra.mxu0 0
      %743 = vmatpush.bf16.xpose.msra.mxu0 0
      %744 = vmatpush.bf16.xpose.msra.mxu0 0
      %745 = vmatpush.bf16.xpose.msra.mxu0 0
      %746 = vmatpush.bf16.xpose.msra.mxu0 0
      %747 = vmatpush.bf16.xpose.msra.mxu0 0
      %748 = vmatpush.bf16.xpose.msra.mxu0 0
      %749 = vmatpush.bf16.xpose.msra.mxu0 %v740
      %750 = vmatmul.bf16.gmra.mxu0 %v737
      %v751 = vpop.f32.mrf.mxu0
      %v752 = vadd.f32 %v729, %v751
      %v753 = vpop.f32.mrf.mxu0
      %754 = vdwg.mxu0
      %v756 = vunpack.c.l.b16 %v728
      %v757 = vpack.c.b16 %v756, %v756
      %758 = vrot.lane.b32.xlu0 %v757, 96
      %v759 = vpop.permute.xlu0 %758
      %v761 = vsel %vm735, %v726, 0
      %v764 = vsel %vm735, %v759, 0
      %766 = vmatpush.bf16.xpose.msra.mxu0 0
      %767 = vmatpush.bf16.xpose.msra.mxu0 0
      %768 = vmatpush.bf16.xpose.msra.mxu0 0
      %769 = vmatpush.bf16.xpose.msra.mxu0 0
      %770 = vmatpush.bf16.xpose.msra.mxu0 0
      %771 = vmatpush.bf16.xpose.msra.mxu0 0
      %772 = vmatpush.bf16.xpose.msra.mxu0 0
      %773 = vmatpush.bf16.xpose.msra.mxu0 %v764
      %774 = vmatmul.bf16.gmra.mxu0 %v761
      %v775 = vpop.f32.mrf.mxu0
      %v776 = vadd.f32 %v729, %v775
      %v777 = vpop.f32.mrf.mxu0
      %778 = vdwg.mxu0
      %v779 = vsel %vm735, %v752, -inf
      %780 = vmax.xlane.f32.xlu0 %v779
      %v781 = vpop.xlane.xlu0 %780
      %v782 = vsel %vm735, %v776, -inf
      %783 = vmax.xlane.f32.xlu0 %v782
      %v784 = vpop.xlane.xlu0 %783
      %v785 = vsub.f32 %v752, %v781
      %v786 = vsub.f32 %v776, %v784
      %v787 = vmul.f32 %v785, 1.442695
      %v788 = vpow.pop %v787
      %v789 = vmul.f32 %v786, 1.442695
      %v790 = vpow.pop %v789
      %v791 = vsel %vm735, %v788, 0.0
      %792 = vadd.xlane.f32.xlu0 %v791
      %v793 = vpop.xlane.xlu0 %792
      %v794 = vsel %vm735, %v790, 0.0
      %795 = vadd.xlane.f32.xlu0 %v794
      %v796 = vpop.xlane.xlu0 %795
      %v797 = vrcp.pop %v793
      %v798 = vrcp.pop %v796
      %v799 = vmul.f32 %v788, %v797
      %v800 = vmul.f32 %v790, %v798
      %v801 = vpack.c.bf16 %v799, %v799
      %v802 = vpack.c.bf16 %v800, %v800
      %803 = vrot.lane.b32.xlu0 %v732, 64
      %v804 = vpop.permute.xlu0 %803
      %v806 = vsel %vm735, %v801, 0
      %vm808 = vcmask 1043456
      %v810 = vsel %vm808, %v804, 0
      %812 = vmatpush.bf16.msra.mxu0 0
      %813 = vmatpush.bf16.msra.mxu0 0
      %814 = vmatpush.bf16.msra.mxu0 0
      %815 = vmatpush.bf16.msra.mxu0 0
      %816 = vmatpush.bf16.msra.mxu0 0
      %817 = vmatpush.bf16.msra.mxu0 0
      %818 = vmatpush.bf16.msra.mxu0 0
      %819 = vmatpush.bf16.msra.mxu0 %v810
      %820 = vmatmul.bf16.gmra.mxu0 %v806
      %v821 = vpop.f32.mrf.mxu0
      %v822 = vadd.f32 0.0, %v821
      %v823 = vpop.f32.mrf.mxu0
      %824 = vdwg.mxu0
      %825 = vrot.lane.b32.xlu0 %v757, 64
      %v826 = vpop.permute.xlu0 %825
      %v828 = vsel %vm735, %v802, 0
      %v831 = vsel %vm808, %v826, 0
      %833 = vmatpush.bf16.msra.mxu0 0
      %834 = vmatpush.bf16.msra.mxu0 0
      %835 = vmatpush.bf16.msra.mxu0 0
      %836 = vmatpush.bf16.msra.mxu0 0
      %837 = vmatpush.bf16.msra.mxu0 0
      %838 = vmatpush.bf16.msra.mxu0 0
      %839 = vmatpush.bf16.msra.mxu0 0
      %840 = vmatpush.bf16.msra.mxu0 %v831
      %841 = vmatmul.bf16.gmra.mxu0 %v828
      %v842 = vpop.f32.mrf.mxu0
      %v843 = vadd.f32 0.0, %v842
      %v844 = vpop.f32.mrf.mxu0
      %845 = vdwg.mxu0
      %v847 = vunpack.c.l.b16 %v725
      %v848 = vpack.c.b16 %v847, %v847
      %849 = vrot.lane.b32.xlu0 %v848, 120
      %v850 = vpop.permute.xlu0 %849
      %851 = vrot.lane.b32.xlu0 %v732, 88
      %v852 = vpop.permute.xlu0 %851
      %v854 = vsel %vm735, %v850, 0
      %v857 = vsel %vm735, %v852, 0
      %859 = vmatpush.bf16.xpose.msra.mxu0 0
      %860 = vmatpush.bf16.xpose.msra.mxu0 0
      %861 = vmatpush.bf16.xpose.msra.mxu0 0
      %862 = vmatpush.bf16.xpose.msra.mxu0 0
      %863 = vmatpush.bf16.xpose.msra.mxu0 0
      %864 = vmatpush.bf16.xpose.msra.mxu0 0
      %865 = vmatpush.bf16.xpose.msra.mxu0 0
      %866 = vmatpush.bf16.xpose.msra.mxu0 %v857
      %867 = vmatmul.bf16.gmra.mxu0 %v854
      %v868 = vpop.f32.mrf.mxu0
      %v869 = vadd.f32 %v729, %v868
      %v870 = vpop.f32.mrf.mxu0
      %871 = vdwg.mxu0
      %v873 = vunpack.c.l.b16 %v726
      %v874 = vpack.c.b16 %v873, %v873
      %875 = vrot.lane.b32.xlu0 %v874, 120
      %v876 = vpop.permute.xlu0 %875
      %877 = vrot.lane.b32.xlu0 %v757, 88
      %v878 = vpop.permute.xlu0 %877
      %v880 = vsel %vm735, %v876, 0
      %v883 = vsel %vm735, %v878, 0
      %885 = vmatpush.bf16.xpose.msra.mxu0 0
      %886 = vmatpush.bf16.xpose.msra.mxu0 0
      %887 = vmatpush.bf16.xpose.msra.mxu0 0
      %888 = vmatpush.bf16.xpose.msra.mxu0 0
      %889 = vmatpush.bf16.xpose.msra.mxu0 0
      %890 = vmatpush.bf16.xpose.msra.mxu0 0
      %891 = vmatpush.bf16.xpose.msra.mxu0 0
      %892 = vmatpush.bf16.xpose.msra.mxu0 %v883
      %893 = vmatmul.bf16.gmra.mxu0 %v880
      %v894 = vpop.f32.mrf.mxu0
      %v895 = vadd.f32 %v729, %v894
      %v896 = vpop.f32.mrf.mxu0
      %897 = vdwg.mxu0
      %v898 = vsel %vm735, %v869, -inf
      %899 = vmax.xlane.f32.xlu0 %v898
      %v900 = vpop.xlane.xlu0 %899
      %v901 = vsel %vm735, %v895, -inf
      %902 = vmax.xlane.f32.xlu0 %v901
      %v903 = vpop.xlane.xlu0 %902
      %v904 = vsub.f32 %v869, %v900
      %v905 = vsub.f32 %v895, %v903
      %v906 = vmul.f32 %v904, 1.442695
      %v907 = vpow.pop %v906
      %v908 = vmul.f32 %v905, 1.442695
      %v909 = vpow.pop %v908
      %v910 = vsel %vm735, %v907, 0.0
      %911 = vadd.xlane.f32.xlu0 %v910
      %v912 = vpop.xlane.xlu0 %911
      %v913 = vsel %vm735, %v909, 0.0
      %914 = vadd.xlane.f32.xlu0 %v913
      %v915 = vpop.xlane.xlu0 %914
      %v916 = vrcp.pop %v912
      %v917 = vrcp.pop %v915
      %v918 = vmul.f32 %v907, %v916
      %v919 = vmul.f32 %v909, %v917
      %v920 = vpack.c.bf16 %v918, %v918
      %v921 = vpack.c.bf16 %v919, %v919
      %922 = vrot.lane.b32.xlu0 %v732, 56
      %v923 = vpop.permute.xlu0 %922
      %v925 = vsel %vm735, %v920, 0
      %v928 = vsel %vm808, %v923, 0
      %930 = vmatpush.bf16.msra.mxu0 0
      %931 = vmatpush.bf16.msra.mxu0 0
      %932 = vmatpush.bf16.msra.mxu0 0
      %933 = vmatpush.bf16.msra.mxu0 0
      %934 = vmatpush.bf16.msra.mxu0 0
      %935 = vmatpush.bf16.msra.mxu0 0
      %936 = vmatpush.bf16.msra.mxu0 0
      %937 = vmatpush.bf16.msra.mxu0 %v928
      %938 = vmatmul.bf16.gmra.mxu0 %v925
      %v939 = vpop.f32.mrf.mxu0
      %v940 = vadd.f32 0.0, %v939
      %v941 = vpop.f32.mrf.mxu0
      %942 = vdwg.mxu0
      %943 = vrot.lane.b32.xlu0 %v757, 56
      %v944 = vpop.permute.xlu0 %943
      %v946 = vsel %vm735, %v921, 0
      %v949 = vsel %vm808, %v944, 0
      %951 = vmatpush.bf16.msra.mxu0 0
      %952 = vmatpush.bf16.msra.mxu0 0
      %953 = vmatpush.bf16.msra.mxu0 0
      %954 = vmatpush.bf16.msra.mxu0 0
      %955 = vmatpush.bf16.msra.mxu0 0
      %956 = vmatpush.bf16.msra.mxu0 0
      %957 = vmatpush.bf16.msra.mxu0 0
      %958 = vmatpush.bf16.msra.mxu0 %v949
      %959 = vmatmul.bf16.gmra.mxu0 %v946
      %v960 = vpop.f32.mrf.mxu0
      %v961 = vadd.f32 0.0, %v960
      %v962 = vpop.f32.mrf.mxu0
      %963 = vdwg.mxu0
      %964 = vrot.lane.b32.xlu0 %v848, 112
      %v965 = vpop.permute.xlu0 %964
      %966 = vrot.lane.b32.xlu0 %v732, 80
      %v967 = vpop.permute.xlu0 %966
      %v969 = vsel %vm735, %v965, 0
      %v972 = vsel %vm735, %v967, 0
      %974 = vmatpush.bf16.xpose.msra.mxu0 0
      %975 = vmatpush.bf16.xpose.msra.mxu0 0
      %976 = vmatpush.bf16.xpose.msra.mxu0 0
      %977 = vmatpush.bf16.xpose.msra.mxu0 0
      %978 = vmatpush.bf16.xpose.msra.mxu0 0
      %979 = vmatpush.bf16.xpose.msra.mxu0 0
      %980 = vmatpush.bf16.xpose.msra.mxu0 0
      %981 = vmatpush.bf16.xpose.msra.mxu0 %v972
      %982 = vmatmul.bf16.gmra.mxu0 %v969
      %v983 = vpop.f32.mrf.mxu0
      %v984 = vadd.f32 %v729, %v983
      %v985 = vpop.f32.mrf.mxu0
      %986 = vdwg.mxu0
      %987 = vrot.lane.b32.xlu0 %v874, 112
      %v988 = vpop.permute.xlu0 %987
      %989 = vrot.lane.b32.xlu0 %v757, 80
      %v990 = vpop.permute.xlu0 %989
      %v992 = vsel %vm735, %v988, 0
      %v995 = vsel %vm735, %v990, 0
      %997 = vmatpush.bf16.xpose.msra.mxu0 0
      %998 = vmatpush.bf16.xpose.msra.mxu0 0
      %999 = vmatpush.bf16.xpose.msra.mxu0 0
      %1000 = vmatpush.bf16.xpose.msra.mxu0 0
      %1001 = vmatpush.bf16.xpose.msra.mxu0 0
      %1002 = vmatpush.bf16.xpose.msra.mxu0 0
      %1003 = vmatpush.bf16.xpose.msra.mxu0 0
      %1004 = vmatpush.bf16.xpose.msra.mxu0 %v995
      %1005 = vmatmul.bf16.gmra.mxu0 %v992
      %v1006 = vpop.f32.mrf.mxu0
      %v1007 = vadd.f32 %v729, %v1006
      %v1008 = vpop.f32.mrf.mxu0
      %1009 = vdwg.mxu0
      %v1010 = vsel %vm735, %v984, -inf
      %1011 = vmax.xlane.f32.xlu0 %v1010
      %v1012 = vpop.xlane.xlu0 %1011
      %v1013 = vsel %vm735, %v1007, -inf
      %1014 = vmax.xlane.f32.xlu0 %v1013
      %v1015 = vpop.xlane.xlu0 %1014
      %v1016 = vsub.f32 %v984, %v1012
      %v1017 = vsub.f32 %v1007, %v1015
      %v1018 = vmul.f32 %v1016, 1.442695
      %v1019 = vpow.pop %v1018
      %v1020 = vmul.f32 %v1017, 1.442695
      %v1021 = vpow.pop %v1020
      %v1022 = vsel %vm735, %v1019, 0.0
      %1023 = vadd.xlane.f32.xlu0 %v1022
      %v1024 = vpop.xlane.xlu0 %1023
      %v1025 = vsel %vm735, %v1021, 0.0
      %1026 = vadd.xlane.f32.xlu0 %v1025
      %v1027 = vpop.xlane.xlu0 %1026
      %v1028 = vrcp.pop %v1024
      %v1029 = vrcp.pop %v1027
      %v1030 = vmul.f32 %v1019, %v1028
      %v1031 = vmul.f32 %v1021, %v1029
      %v1032 = vpack.c.bf16 %v1030, %v1030
      %v1033 = vpack.c.bf16 %v1031, %v1031
      %1034 = vrot.lane.b32.xlu0 %v732, 48
      %v1035 = vpop.permute.xlu0 %1034
      %v1037 = vsel %vm735, %v1032, 0
      %v1040 = vsel %vm808, %v1035, 0
      %1042 = vmatpush.bf16.msra.mxu0 0
      %1043 = vmatpush.bf16.msra.mxu0 0
      %1044 = vmatpush.bf16.msra.mxu0 0
      %1045 = vmatpush.bf16.msra.mxu0 0
      %1046 = vmatpush.bf16.msra.mxu0 0
      %1047 = vmatpush.bf16.msra.mxu0 0
      %1048 = vmatpush.bf16.msra.mxu0 0
      %1049 = vmatpush.bf16.msra.mxu0 %v1040
      %1050 = vmatmul.bf16.gmra.mxu0 %v1037
      %v1051 = vpop.f32.mrf.mxu0
      %v1052 = vadd.f32 0.0, %v1051
      %v1053 = vpop.f32.mrf.mxu0
      %1054 = vdwg.mxu0
      %1055 = vrot.lane.b32.xlu0 %v757, 48
      %v1056 = vpop.permute.xlu0 %1055
      %v1058 = vsel %vm735, %v1033, 0
      %v1061 = vsel %vm808, %v1056, 0
      %1063 = vmatpush.bf16.msra.mxu0 0
      %1064 = vmatpush.bf16.msra.mxu0 0
      %1065 = vmatpush.bf16.msra.mxu0 0
      %1066 = vmatpush.bf16.msra.mxu0 0
      %1067 = vmatpush.bf16.msra.mxu0 0
      %1068 = vmatpush.bf16.msra.mxu0 0
      %1069 = vmatpush.bf16.msra.mxu0 0
      %1070 = vmatpush.bf16.msra.mxu0 %v1061
      %1071 = vmatmul.bf16.gmra.mxu0 %v1058
      %v1072 = vpop.f32.mrf.mxu0
      %v1073 = vadd.f32 0.0, %v1072
      %v1074 = vpop.f32.mrf.mxu0
      %1075 = vdwg.mxu0
      %1076 = vrot.lane.b32.xlu0 %v848, 104
      %v1077 = vpop.permute.xlu0 %1076
      %1078 = vrot.lane.b32.xlu0 %v732, 72
      %v1079 = vpop.permute.xlu0 %1078
      %v1081 = vsel %vm735, %v1077, 0
      %v1084 = vsel %vm735, %v1079, 0
      %1086 = vmatpush.bf16.xpose.msra.mxu0 0
      %1087 = vmatpush.bf16.xpose.msra.mxu0 0
      %1088 = vmatpush.bf16.xpose.msra.mxu0 0
      %1089 = vmatpush.bf16.xpose.msra.mxu0 0
      %1090 = vmatpush.bf16.xpose.msra.mxu0 0
      %1091 = vmatpush.bf16.xpose.msra.mxu0 0
      %1092 = vmatpush.bf16.xpose.msra.mxu0 0
      %1093 = vmatpush.bf16.xpose.msra.mxu0 %v1084
      %1094 = vmatmul.bf16.gmra.mxu0 %v1081
      %v1095 = vpop.f32.mrf.mxu0
      %v1096 = vadd.f32 %v729, %v1095
      %v1097 = vpop.f32.mrf.mxu0
      %1098 = vdwg.mxu0
      %1099 = vrot.lane.b32.xlu0 %v874, 104
      %v1100 = vpop.permute.xlu0 %1099
      %1101 = vrot.lane.b32.xlu0 %v757, 72
      %v1102 = vpop.permute.xlu0 %1101
      %v1104 = vsel %vm735, %v1100, 0
      %v1107 = vsel %vm735, %v1102, 0
      %1109 = vmatpush.bf16.xpose.msra.mxu0 0
      %1110 = vmatpush.bf16.xpose.msra.mxu0 0
      %1111 = vmatpush.bf16.xpose.msra.mxu0 0
      %1112 = vmatpush.bf16.xpose.msra.mxu0 0
      %1113 = vmatpush.bf16.xpose.msra.mxu0 0
      %1114 = vmatpush.bf16.xpose.msra.mxu0 0
      %1115 = vmatpush.bf16.xpose.msra.mxu0 0
      %1116 = vmatpush.bf16.xpose.msra.mxu0 %v1107
      %1117 = vmatmul.bf16.gmra.mxu0 %v1104
      %v1118 = vpop.f32.mrf.mxu0
      %v1119 = vadd.f32 %v729, %v1118
      %v1120 = vpop.f32.mrf.mxu0
      %1121 = vdwg.mxu0
      %v1122 = vsel %vm735, %v1096, -inf
      %1123 = vmax.xlane.f32.xlu0 %v1122
      %v1124 = vpop.xlane.xlu0 %1123
      %v1125 = vsel %vm735, %v1119, -inf
      %1126 = vmax.xlane.f32.xlu0 %v1125
      %v1127 = vpop.xlane.xlu0 %1126
      %v1128 = vsub.f32 %v1096, %v1124
      %v1129 = vsub.f32 %v1119, %v1127
      %v1130 = vmul.f32 %v1128, 1.442695
      %v1131 = vpow.pop %v1130
      %v1132 = vmul.f32 %v1129, 1.442695
      %v1133 = vpow.pop %v1132
      %v1134 = vsel %vm735, %v1131, 0.0
      %1135 = vadd.xlane.f32.xlu0 %v1134
      %v1136 = vpop.xlane.xlu0 %1135
      %v1137 = vsel %vm735, %v1133, 0.0
      %1138 = vadd.xlane.f32.xlu0 %v1137
      %v1139 = vpop.xlane.xlu0 %1138
      %v1140 = vrcp.pop %v1136
      %v1141 = vrcp.pop %v1139
      %v1142 = vmul.f32 %v1131, %v1140
      %v1143 = vmul.f32 %v1133, %v1141
      %v1144 = vpack.c.bf16 %v1142, %v1142
      %v1145 = vpack.c.bf16 %v1143, %v1143
      %1146 = vrot.lane.b32.xlu0 %v732, 40
      %v1147 = vpop.permute.xlu0 %1146
      %v1149 = vsel %vm735, %v1144, 0
      %v1152 = vsel %vm808, %v1147, 0
      %1154 = vmatpush.bf16.msra.mxu0 0
      %1155 = vmatpush.bf16.msra.mxu0 0
      %1156 = vmatpush.bf16.msra.mxu0 0
      %1157 = vmatpush.bf16.msra.mxu0 0
      %1158 = vmatpush.bf16.msra.mxu0 0
      %1159 = vmatpush.bf16.msra.mxu0 0
      %1160 = vmatpush.bf16.msra.mxu0 0
      %1161 = vmatpush.bf16.msra.mxu0 %v1152
      %1162 = vmatmul.bf16.gmra.mxu0 %v1149
      %v1163 = vpop.f32.mrf.mxu0
      %v1164 = vadd.f32 0.0, %v1163
      %v1165 = vpop.f32.mrf.mxu0
      %1166 = vdwg.mxu0
      %1167 = vrot.lane.b32.xlu0 %v757, 40
      %v1168 = vpop.permute.xlu0 %1167
      %v1170 = vsel %vm735, %v1145, 0
      %v1173 = vsel %vm808, %v1168, 0
      %1175 = vmatpush.bf16.msra.mxu0 0
      %1176 = vmatpush.bf16.msra.mxu0 0
      %1177 = vmatpush.bf16.msra.mxu0 0
      %1178 = vmatpush.bf16.msra.mxu0 0
      %1179 = vmatpush.bf16.msra.mxu0 0
      %1180 = vmatpush.bf16.msra.mxu0 0
      %1181 = vmatpush.bf16.msra.mxu0 0
      %1182 = vmatpush.bf16.msra.mxu0 %v1173
      %1183 = vmatmul.bf16.gmra.mxu0 %v1170
      %v1184 = vpop.f32.mrf.mxu0
      %v1185 = vadd.f32 0.0, %v1184
      %v1186 = vpop.f32.mrf.mxu0
      %1187 = vdwg.mxu0
      %1190 = vrot.lane.b32.xlu0 %v940, 8
      %v1191 = vpop.permute.xlu0 %1190
      %1192 = vrot.lane.b32.xlu0 %v961, 8
      %v1193 = vpop.permute.xlu0 %1192
      %1198 = vrot.lane.b32.xlu0 %v1052, 16
      %v1199 = vpop.permute.xlu0 %1198
      %1200 = vrot.lane.b32.xlu0 %v1073, 16
      %v1201 = vpop.permute.xlu0 %1200
      %1206 = vrot.lane.b32.xlu0 %v1164, 24
      %v1207 = vpop.permute.xlu0 %1206
      %1208 = vrot.lane.b32.xlu0 %v1185, 24
      %v1209 = vpop.permute.xlu0 %1208
      %v1212 = vsel %vm735, %v822, %v1191
      %v1213 = vsel %vm735, %v843, %v1193
      %vm1214 = vcmask 130048
      %v1215 = vsel %vm1214, %v1212, %v1199
      %v1216 = vsel %vm1214, %v1213, %v1201
      %vm1217 = vcmask 195584
      %v1218 = vsel %vm1217, %v1215, %v1207
      %v1219 = vsel %vm1217, %v1216, %v1209
      %v1220 = vpack.c.bf16 %v1219, %v1218
      %v1221 = vld [vmem:[%s636] sm:$0xf]
      %v1222 = vld [vmem:[%s636 + $0x4] sm:$0xf]
      %v1223 = vld [vmem:[%s636 + $0x8] sm:$0xf]
      %v1224 = vld [vmem:[%s636 + $0xc] sm:$0xf]
      %v1225 = vld [vmem:[%s639] sm:$0x1]
      %v1227 = vperm.slane %v1225, 0
      %v1233 = vunpack.c.l.b16 %v1221
      %v1234 = vunpack.c.l.b16 %v1222
      %v1235 = vunpack.c.l.b16 %v1223
      %v1236 = vunpack.c.l.b16 %v1224
      %v1237 = vpack.c.b16 %v1234, %v1233
      %v1238 = vpack.c.b16 %v1236, %v1235
      %v1242 = vsel %vm705, %v1220, 0
      %1244 = vmatpush.bf16.msra.mxu0 0
      %1245 = vmatpush.bf16.msra.mxu0 0
      %1246 = vmatpush.bf16.msra.mxu0 0
      %1247 = vmatpush.bf16.msra.mxu0 0
      %1248 = vmatpush.bf16.msra.mxu0 0
      %1249 = vmatpush.bf16.msra.mxu0 0
      %1250 = vmatpush.bf16.msra.mxu0 %v1238
      %1251 = vmatpush.bf16.msra.mxu0 %v1237
      %1252 = vmatmul.bf16.gmra.mxu0 %v1242
      %v1253 = vpop.f32.mrf.mxu0
      %v1254 = vadd.f32 %v1227, %v1253
      %v1255 = vpop.f32.mrf.mxu0
      %v1256 = vadd.f32 %v1227, %v1255
      %1257 = vdwg.mxu0
      %v1258 = vadd.f32 %v682, %v1254
      %v1259 = vadd.f32 %v683, %v1256
      %v1260 = vld [vmem:[%s642] sm:$0x1]
      %v1261 = vld [vmem:[%s645] sm:$0x1]
      %v1262 = vsel %vm705, %v1258, 0.0
      %1263 = vadd.xlane.f32.xlu0 %v1262
      %v1264 = vpop.xlane.xlu0 %1263
      %v1265 = vsel %vm705, %v1259, 0.0
      %1266 = vadd.xlane.f32.xlu0 %v1265
      %v1267 = vpop.xlane.xlu0 %1266
      %v1268 = vrcp.pop 32.0
      %v1269 = vmul.f32 32.0, %v1268
      %v1270 = vsub.f32 1.0, %v1269
      %v1271 = vmul.f32 %v1268, %v1270
      %v1272 = vadd.f32 %v1268, %v1271
      %vm1273 = vweird.f32 %v1268
      %v1274 = vsel %vm1273, %v1268, %v1272
      %v1275 = vmul.f32 %v1264, %v1274
      %v1276 = vmul.f32 %v1267, %v1274
      %v1277 = vsub.f32 %v1258, %v1275
      %v1278 = vsub.f32 %v1259, %v1276
      %v1279 = vmul.f32 %v1277, %v1277
      %v1280 = vmul.f32 %v1278, %v1278
      %v1281 = vsel %vm705, %v1279, 0.0
      %1282 = vadd.xlane.f32.xlu0 %v1281
      %v1283 = vpop.xlane.xlu0 %1282
      %v1284 = vsel %vm705, %v1280, 0.0
      %1285 = vadd.xlane.f32.xlu0 %v1284
      %v1286 = vpop.xlane.xlu0 %1285
      %v1287 = vmul.f32 %v1283, %v1274
      %v1288 = vmul.f32 %v1286, %v1274
      %v1289 = vadd.f32 %v1287, 1e-05
      %v1290 = vadd.f32 %v1288, 1e-05
      %v1291 = vrsqrt.pop %v1289
      %v1292 = vmul.f32 %v1291, %v1289
      %v1293 = vmul.f32 %v1292, %v1291
      %v1294 = vmul.f32 0.5, %v1293
      %v1295 = vsub.f32 1.5, %v1294
      %v1296 = vmul.f32 %v1291, %v1295
      %vm1297 = vweird.f32 %v1289
      %vm1298 = vweird.f32 %v1291
      %vm1299 = vmor %vm1297, %vm1298
      %v1300 = vsel %vm1299, %v1291, %v1296
      %v1301 = vrsqrt.pop %v1290
      %v1302 = vmul.f32 %v1301, %v1290
      %v1303 = vmul.f32 %v1302, %v1301
      %v1304 = vmul.f32 0.5, %v1303
      %v1305 = vsub.f32 1.5, %v1304
      %v1306 = vmul.f32 %v1301, %v1305
      %vm1307 = vweird.f32 %v1290
      %vm1308 = vweird.f32 %v1301
      %vm1309 = vmor %vm1307, %vm1308
      %v1310 = vsel %vm1309, %v1301, %v1306
      %v1311 = vmul.f32 %v1277, %v1300
      %v1312 = vmul.f32 %v1278, %v1310
      %v1314 = vperm.slane %v1260, 0
      %v1316 = vmul.f32 %v1311, %v1314
      %v1317 = vmul.f32 %v1312, %v1314
      %v1319 = vperm.slane %v1261, 0
      %v1321 = vadd.f32 %v1316, %v1319
      %v1322 = vadd.f32 %v1317, %v1319
      %v1323 = vpack.c.bf16 %v1322, %v1321
      %v1324 = vld [vmem:[%s650] sm:$0xf]
      %v1325 = vld [vmem:[%s650 + $0x4] sm:$0xf]
      %v1326 = vld [vmem:[%s650 + $0x8] sm:$0xf]
      %v1327 = vld [vmem:[%s650 + $0xc] sm:$0xf]
      %v1328 = vld [vmem:[%s653] sm:$0x1]
      %v1330 = vperm.slane %v1328, 0
      %v1336 = vunpack.c.l.b16 %v1324
      %v1337 = vunpack.c.l.b16 %v1325
      %v1338 = vunpack.c.l.b16 %v1326
      %v1339 = vunpack.c.l.b16 %v1327
      %v1340 = vpack.c.b16 %v1337, %v1336
      %v1341 = vpack.c.b16 %v1339, %v1338
      %v1345 = vsel %vm705, %v1323, 0
      %1347 = vmatpush.bf16.msra.mxu0 0
      %1348 = vmatpush.bf16.msra.mxu0 0
      %1349 = vmatpush.bf16.msra.mxu0 0
      %1350 = vmatpush.bf16.msra.mxu0 0
      %1351 = vmatpush.bf16.msra.mxu0 0
      %1352 = vmatpush.bf16.msra.mxu0 0
      %1353 = vmatpush.bf16.msra.mxu0 %v1341
      %1354 = vmatpush.bf16.msra.mxu0 %v1340
      %1355 = vmatmul.bf16.gmra.mxu0 %v1345
      %v1356 = vpop.f32.mrf.mxu0
      %v1357 = vadd.f32 %v1330, %v1356
      %v1358 = vpop.f32.mrf.mxu0
      %v1359 = vadd.f32 %v1330, %v1358
      %1360 = vdwg.mxu0
      %v1361 = vmax.f32 %v1357, 0.0
      %v1362 = vmax.f32 %v1359, 0.0
      %v1363 = vpack.c.bf16 %v1362, %v1361
      %v1364 = vld [vmem:[%s658] sm:$0xf]
      %v1365 = vld [vmem:[%s658 + $0x4] sm:$0xf]
      %v1366 = vld [vmem:[%s658 + $0x8] sm:$0xf]
      %v1367 = vld [vmem:[%s658 + $0xc] sm:$0xf]
      %v1368 = vld [vmem:[%s658 + $0x10] sm:$0xf]
      %v1369 = vld [vmem:[%s658 + $0x14] sm:$0xf]
      %v1370 = vld [vmem:[%s658 + $0x18] sm:$0xf]
      %v1371 = vld [vmem:[%s658 + $0x1c] sm:$0xf]
      %v1372 = vld [vmem:[%s661] sm:$0x1]
      %v1374 = vperm.slane %v1372, 0
      %v1384 = vunpack.c.l.b16 %v1364
      %v1385 = vunpack.c.l.b16 %v1365
      %v1386 = vunpack.c.l.b16 %v1366
      %v1387 = vunpack.c.l.b16 %v1367
      %v1388 = vunpack.c.l.b16 %v1368
      %v1389 = vunpack.c.l.b16 %v1369
      %v1390 = vunpack.c.l.b16 %v1370
      %v1391 = vunpack.c.l.b16 %v1371
      %v1392 = vpack.c.b16 %v1385, %v1384
      %v1393 = vpack.c.b16 %v1387, %v1386
      %v1394 = vpack.c.b16 %v1389, %v1388
      %v1395 = vpack.c.b16 %v1391, %v1390
      %vm1400 = vcmask 523264
      %v1402 = vsel %vm1400, %v1363, 0
      %1404 = vmatpush.bf16.msra.mxu0 0
      %1405 = vmatpush.bf16.msra.mxu0 0
      %1406 = vmatpush.bf16.msra.mxu0 0
      %1407 = vmatpush.bf16.msra.mxu0 0
      %1408 = vmatpush.bf16.msra.mxu0 %v1395
      %1409 = vmatpush.bf16.msra.mxu0 %v1394
      %1410 = vmatpush.bf16.msra.mxu0 %v1393
      %1411 = vmatpush.bf16.msra.mxu0 %v1392
      %1412 = vmatmul.bf16.gmra.mxu0 %v1402
      %v1413 = vpop.f32.mrf.mxu0
      %v1414 = vadd.f32 %v1374, %v1413
      %v1415 = vpop.f32.mrf.mxu0
      %v1416 = vadd.f32 %v1374, %v1415
      %1417 = vdwg.mxu0
      %v1418 = vadd.f32 %v1321, %v1414
      %v1419 = vadd.f32 %v1322, %v1416
      %v1420 = vld [vmem:[%s664] sm:$0x1]
      %v1421 = vld [vmem:[%s667] sm:$0x1]
      %v1422 = vsel %vm705, %v1418, 0.0
      %1423 = vadd.xlane.f32.xlu0 %v1422
      %v1424 = vpop.xlane.xlu0 %1423
      %v1425 = vsel %vm705, %v1419, 0.0
      %1426 = vadd.xlane.f32.xlu0 %v1425
      %v1427 = vpop.xlane.xlu0 %1426
      %v1428 = vmul.f32 %v1424, %v1274
      %v1429 = vmul.f32 %v1427, %v1274
      %v1430 = vsub.f32 %v1418, %v1428
      %v1431 = vsub.f32 %v1419, %v1429
      %v1432 = vmul.f32 %v1430, %v1430
      %v1433 = vmul.f32 %v1431, %v1431
      %v1434 = vsel %vm705, %v1432, 0.0
      %1435 = vadd.xlane.f32.xlu0 %v1434
      %v1436 = vpop.xlane.xlu0 %1435
      %v1437 = vsel %vm705, %v1433, 0.0
      %1438 = vadd.xlane.f32.xlu0 %v1437
      %v1439 = vpop.xlane.xlu0 %1438
      %v1440 = vmul.f32 %v1436, %v1274
      %v1441 = vmul.f32 %v1439, %v1274
      %v1442 = vadd.f32 %v1440, 1e-05
      %v1443 = vadd.f32 %v1441, 1e-05
      %v1444 = vrsqrt.pop %v1442
      %v1445 = vmul.f32 %v1444, %v1442
      %v1446 = vmul.f32 %v1445, %v1444
      %v1447 = vmul.f32 0.5, %v1446
      %v1448 = vsub.f32 1.5, %v1447
      %v1449 = vmul.f32 %v1444, %v1448
      %vm1450 = vweird.f32 %v1442
      %vm1451 = vweird.f32 %v1444
      %vm1452 = vmor %vm1450, %vm1451
      %v1453 = vsel %vm1452, %v1444, %v1449
      %v1454 = vrsqrt.pop %v1443
      %v1455 = vmul.f32 %v1454, %v1443
      %v1456 = vmul.f32 %v1455, %v1454
      %v1457 = vmul.f32 0.5, %v1456
      %v1458 = vsub.f32 1.5, %v1457
      %v1459 = vmul.f32 %v1454, %v1458
      %vm1460 = vweird.f32 %v1443
      %vm1461 = vweird.f32 %v1454
      %vm1462 = vmor %vm1460, %vm1461
      %v1463 = vsel %vm1462, %v1454, %v1459
      %v1464 = vmul.f32 %v1430, %v1453
      %v1465 = vmul.f32 %v1431, %v1463
      %v1467 = vperm.slane %v1420, 0
      %v1469 = vmul.f32 %v1464, %v1467
      %v1470 = vmul.f32 %v1465, %v1467
      %v1472 = vperm.slane %v1421, 0
      %v1474 = vadd.f32 %v1469, %v1472
      %v1475 = vadd.f32 %v1470, %v1472
      %1476 = vst.msk [vmem:[#allocation2] sm:$0xff] %vm705, %v1474
      %1477 = vst.msk [vmem:[#allocation2 + $0x8] sm:$0xff] %vm705, %v1475
      %p1478 = scmp.eq.s32.totalorder %s30, 1
      // Predicated region
      $region81: #{transformer_forward.2} parent=75 // pred_check
        %p1479 = pneg %p1478
      $region82: #{transformer_forward.2} parent=75 // pred_check_branch
        %1481 = sbr.rel (%p1479) target = $region84
      $region83: #{transformer_forward.2} parent=75 // pred_region
        %v1482 = vsel %vm705, %v1474, 0.0
        %v1483 = vsel %vm705, %v1475, 0.0
        %v1484 = vadd.f32 %v1482, %v1483
        %1485 = vst.msk [vmem:[%s671] sm:$0xff] %vm705, %v1484
      $region84: #{transformer_forward.2} parent=75 // pred_fallthru
        _
      %p1486 = scmp.lt.s32.totalorder %s29, 1
      %s1487 = scalar_select %p1486, %s29, 1
      %s1488 = smul.addr %s1487, 8
      %s1489 = scalar_lea.vmem %s14, %s1488
      // Predicated region
      $region85: #{transformer_forward.2} parent=75 // pred_check
        %p1490 = pneg %p414
      $region86: #{transformer_forward.2} parent=75 // pred_check_branch
        %1492 = sbr.rel (%p1490) target = $region88
      $region87: #{transformer_forward.2} parent=75 // pred_region
        _
      $region88: #{transformer_forward.2} parent=75 // pred_fallthru
        _
    $region76: #{transformer_forward.2} parent=5 // pred_fallthru
      _
    %p1493 = scmp.le.s32.totalorder 2, %s20
    // Predicated region
    $region89: #{transformer_forward.2} parent=5 // pred_check
      %p1494 = pneg %p1493
    $region90: #{transformer_forward.2} parent=5 // pred_check_branch
      %1496 = sbr.rel (%p1494) target = $region92
    $region91: #{transformer_forward.2} parent=5 // pred_region
      %s1497 = ssub.s32 %s20, 2
      // Predicated region
      $region93: #{transformer_forward.2} parent=91 // pred_check
        %p1498 = pneg %p420
      $region94: #{transformer_forward.2} parent=91 // pred_check_branch
        %1500 = sbr.rel (%p1498) target = $region96
      $region95: #{transformer_forward.2} parent=91 // pred_region
        %p1501 = scmp.lt.s32.totalorder %s31, 1
        %s1502 = scalar_select %p1501, %s31, 1
        %s1503 = smul.addr %s1502, 8
        %s1504 = scalar_lea.vmem %s14, %s1503
      $region96: #{transformer_forward.2} parent=91 // pred_fallthru
        _
    $region92: #{transformer_forward.2} parent=5 // pred_fallthru
      _
  $region6: #{transformer_forward.2} parent=0 // loop_footer
    %s24 = sadd.s32 1, %s20
  $region7: #{transformer_forward.2} parent=0 // loop_footer_branch
    %19 = sbr.rel target = $region3
  $region8: #{transformer_forward.2} parent=0 // loop_exit
    _

</llo_original>
